<compile_context>
chip_gen: v5e
topology: v5e:2x2
jax: 0.10.0
libtpu: 0.0.40
codegen_flags: <defaults>
</compile_context>

<pallas_src>
import jax
import jax.numpy as jnp
import numpy as np
from jax.experimental import pallas as pl
from jax.experimental.pallas import tpu as pltpu

KH = KW = 3      # depthwise conv kernel size (padding="same")
PADL = 8         # left padding inside the scratch -> sublane-aligned stores


def _round_up(x, m):
    return ((x + m - 1) // m) * m


def residual_block_kernel(p_ref, x_ref, top_ref, bot_ref, o_ref, xp_ref):
    """Fused Residual(fn)(x) = fn(x) + x for one (batch, row-tile) block.

    p_ref   : VMEM (12, C) f32 per-channel params:
              rows 0..8 = depthwise conv taps (row-major kh*KW+kw)
              row 9     = conv bias
              row 10    = BN scale  (gamma / sqrt(var + eps))
              row 11    = BN shift  (beta - mean * scale)
    x_ref   : VMEM (TH, W, C) input row tile (conv + residual branch)
    top_ref : VMEM (1, W, C)  row above the tile (masked to 0 at image top)
    bot_ref : VMEM (1, W, C)  row below the tile (masked to 0 at image bottom)
    o_ref   : VMEM (TH, W, C) output tile
    xp_ref  : VMEM (TH+2, Wp, C) f32 scratch: zero-padded conv window
    """
    TH, W, C = x_ref.shape
    i = pl.program_id(1)
    nt = pl.num_programs(1)
    f32 = jnp.float32

    xv = x_ref[...].astype(f32)                       # (TH, W, C) read once

    # Assemble the zero-padded window in VMEM (no padded copy in HBM).
    xp_ref[...] = jnp.zeros(xp_ref.shape, f32)
    xp_ref[1:TH + 1, PADL:PADL + W, :] = xv           # aligned interior store
    top = jnp.where(i > 0, top_ref[...].astype(f32), 0.0)
    bot = jnp.where(i < nt - 1, bot_ref[...].astype(f32), 0.0)
    xp_ref[0:1, PADL:PADL + W, :] = top
    xp_ref[TH + 1:TH + 2, PADL:PADL + W, :] = bot

    # Per-channel params loaded once (hoisted out of the tap loop).
    pvals = p_ref[...]                                # (12, C) f32

    # Depthwise 3x3 conv as 9 shifted multiply-accumulates on the VPU,
    # reduced with a pairwise tree.
    parts = []
    for kh in range(KH):
        for kw in range(KW):
            win = xp_ref[kh:kh + TH, PADL - 1 + kw:PADL - 1 + kw + W, :]
            parts.append(win * pvals[kh * KW + kw, :])
    while len(parts) > 1:
        nxt = [parts[j] + parts[j + 1] for j in range(0, len(parts) - 1, 2)]
        if len(parts) % 2:
            nxt.append(parts[-1])
        parts = nxt
    acc = parts[0] + pvals[KH * KW, :]                # + conv bias

    y = jax.nn.gelu(acc, approximate=True)            # GELU (tanh, EUP)
    y = y * pvals[KH * KW + 1, :] + pvals[KH * KW + 2, :]   # folded BN

    o_ref[...] = (y + xv).astype(o_ref.dtype)         # residual add


def _pick_row_tile(H, W, C, itemsize, budget_bytes=6 * 1024 * 1024):
    """Largest divisor of H whose double-buffered tiles fit the VMEM budget."""
    wp = PADL + _round_up(W + 1, 8)
    per_row = 2 * W * C * (2 * itemsize) + wp * C * 4   # 2x(in+out) + scratch
    th_max = max(1, budget_bytes // max(per_row, 1))
    th = 1
    for t in range(1, H + 1):
        if H % t == 0 and t <= th_max:
            th = t
    return th


def residual_convmixer_block_nhwc(x_nhwc, w_dw, b_dw, gamma, beta, mean, var,
                                  eps=1e-5):
    """Residual(depthwise-conv -> GELU -> BN)(x) for NHWC input."""
    N, H, W, C = x_nhwc.shape

    # Fold BN running stats into a per-channel affine (inference semantics).
    scale = gamma / jnp.sqrt(var + eps)
    shift = beta - mean * scale
    params = jnp.concatenate(
        [w_dw.reshape(C, KH * KW).T,        # (9, C) conv taps
         b_dw[None, :],                     # (1, C) conv bias
         scale[None, :],                    # (1, C) BN scale
         shift[None, :]],                   # (1, C) BN shift
        axis=0).astype(jnp.float32)         # (12, C)

    TH = _pick_row_tile(H, W, C, x_nhwc.dtype.itemsize)
    num_tiles = H // TH
    Wp = PADL + _round_up(W + 1, 8)

    out = pl.pallas_call(
        residual_block_kernel,
        out_shape=jax.ShapeDtypeStruct((N, H, W, C), x_nhwc.dtype),
        grid_spec=pltpu.PrefetchScalarGridSpec(
            num_scalar_prefetch=0,
            grid=(N, num_tiles),
            in_specs=[
                pl.BlockSpec((KH * KW + 3, C), lambda n, i: (0, 0)),
                pl.BlockSpec((None, TH, W, C), lambda n, i: (n, i, 0, 0)),
                # Halo rows: 1-row blocks of the same array; clamped at the
                # image border and masked to zero inside the kernel.
                pl.BlockSpec((None, 1, W, C),
                             lambda n, i: (n, jnp.maximum(i * TH - 1, 0), 0, 0)),
                pl.BlockSpec((None, 1, W, C),
                             lambda n, i: (n, jnp.minimum((i + 1) * TH, H - 1),
                                           0, 0)),
            ],
            out_specs=pl.BlockSpec((None, TH, W, C), lambda n, i: (n, i, 0, 0)),
            scratch_shapes=[pltpu.VMEM((TH + 2, Wp, C), jnp.float32)],
        ),
        compiler_params=pltpu.CompilerParams(
            dimension_semantics=("parallel", "parallel"),
            vmem_limit_bytes=32 * 1024 * 1024),
    )(params, x_nhwc, x_nhwc, x_nhwc)
    return out


def residual_convmixer_block(x_nchw, w_dw, b_dw, gamma, beta, mean, var,
                             eps=1e-5):
    """PyTorch-layout (NCHW) wrapper around the NHWC kernel."""
    x = jnp.transpose(x_nchw, (0, 2, 3, 1))            # NCHW -> NHWC
    out = residual_convmixer_block_nhwc(x, w_dw, b_dw, gamma, beta, mean, var,
                                        eps=eps)
    return jnp.transpose(out, (0, 3, 1, 2))            # NHWC -> NCHW


def reference(x_nchw, w_dw, b_dw, gamma, beta, mean, var, eps=1e-5):
    """Pure-JAX reference of the same Residual(fn)(x)."""
    N, C, H, W = x_nchw.shape
    x = jnp.transpose(x_nchw, (0, 2, 3, 1))
    w = jnp.transpose(w_dw, (2, 3, 1, 0))              # (kH, kW, 1, C) HWIO
    y = jax.lax.conv_general_dilated(
        x, w, window_strides=(1, 1), padding="SAME",
        dimension_numbers=("NHWC", "HWIO", "NHWC"),
        feature_group_count=C)
    y = y + b_dw
    y = jax.nn.gelu(y, approximate=True)
    y = (y - mean) / jnp.sqrt(var + eps) * gamma + beta
    return jnp.transpose(y + x, (0, 3, 1, 2))


if __name__ == "__main__":
    N, C, H, W = 2, 4, 16, 16
    key = jax.random.PRNGKey(0)
    k1, k2, k3, k4, k5, k6, k7 = jax.random.split(key, 7)

    x     = jax.random.normal(k1, (N, C, H, W), jnp.float32)
    w_dw  = 0.2 * jax.random.normal(k2, (C, 1, KH, KW), jnp.float32)  # dw conv weight
    b_dw  = 0.1 * jax.random.normal(k3, (C,), jnp.float32)            # conv bias
    gamma = 1.0 + 0.1 * jax.random.normal(k4, (C,), jnp.float32)      # BN weight
    beta  = 0.1 * jax.random.normal(k5, (C,), jnp.float32)            # BN bias
    mean  = 0.1 * jax.random.normal(k6, (C,), jnp.float32)            # BN running_mean
    var   = 0.5 + jnp.abs(jax.random.normal(k7, (C,), jnp.float32))   # BN running_var

    out = residual_convmixer_block(x, w_dw, b_dw, gamma, beta, mean, var)
    out = jax.block_until_ready(out)

    ref = reference(x, w_dw, b_dw, gamma, beta, mean, var)
    np.testing.assert_allclose(np.asarray(out), np.asarray(ref),
                               rtol=1e-5, atol=1e-5)
    print("KERNEL_OK")
</pallas_src>

<mosaic_0001>
module attributes {stable_mosaic.version = 11 : i64} {
  func.func @residual_block_kernel(%arg0: i32, %arg1: i32, %arg2: memref<12x4xf32, #tpu.memory_space<vmem>>, %arg3: memref<1x16x16x4xf32, #tpu.memory_space<vmem>>, %arg4: memref<1x1x16x4xf32, #tpu.memory_space<vmem>>, %arg5: memref<1x1x16x4xf32, #tpu.memory_space<vmem>>, %arg6: memref<1x16x16x4xf32, #tpu.memory_space<vmem>>, %arg7: memref<18x32x4xf32, #tpu.memory_space<vmem>>) attributes {dimension_semantics = [#tpu.dimension_semantics<parallel>, #tpu.dimension_semantics<parallel>], iteration_bounds = array<i64: 2, 1>, scalar_prefetch = 0 : i64, scratch_operands = 1 : i64, tpu.core_type = #tpu.core_type<tc>, window_params = [{pipeline_mode = #tpu.pipeline_mode<synchronous>, transform_indices = @transform_0, window_bounds = array<i64: 12, 4>}, {transform_indices = @transform_1, window_bounds = array<i64: 1, 16, 16, 4>}, {transform_indices = @transform_2, window_bounds = array<i64: 1, 1, 16, 4>}, {transform_indices = @transform_3, window_bounds = array<i64: 1, 1, 16, 4>}, {transform_indices = @transform_4, window_bounds = array<i64: 1, 16, 16, 4>}]} {
    %c0 = arith.constant 0 : index
    %c0_0 = arith.constant 0 : index
    %c0_1 = arith.constant 0 : index
    %c0_2 = arith.constant 0 : index
    %0 = vector.load %arg3[%c0, %c0_0, %c0_1, %c0_2] : memref<1x16x16x4xf32, #tpu.memory_space<vmem>>, vector<1x16x16x4xf32>
    %1 = vector.shape_cast %0 : vector<1x16x16x4xf32> to vector<16x16x4xf32>
    %cst = arith.constant 0.000000e+00 : f32
    %2 = vector.broadcast %cst : f32 to vector<18x32x4xf32>
    %c0_3 = arith.constant 0 : index
    %c0_4 = arith.constant 0 : index
    %c0_5 = arith.constant 0 : index
    %3 = vector.load %arg7[%c0_3, %c0_4, %c0_5] : memref<18x32x4xf32, #tpu.memory_space<vmem>>, vector<18x32x4xf32>
    tpu.vector_store %arg7[%c0_3, %c0_4, %c0_5], %2 {strides = array<i32>} : memref<18x32x4xf32, #tpu.memory_space<vmem>>, vector<18x32x4xf32>,
    %c1 = arith.constant 1 : index
    %c8 = arith.constant 8 : index
    %c0_6 = arith.constant 0 : index
    %4 = vector.load %arg7[%c1, %c8, %c0_6] : memref<18x32x4xf32, #tpu.memory_space<vmem>>, vector<16x16x4xf32>
    tpu.vector_store %arg7[%c1, %c8, %c0_6], %1 {strides = array<i32>} : memref<18x32x4xf32, #tpu.memory_space<vmem>>, vector<16x16x4xf32>,
    %c0_i32 = arith.constant 0 : i32
    %5 = arith.cmpi sgt, %arg1, %c0_i32 : i32
    %c0_7 = arith.constant 0 : index
    %c0_8 = arith.constant 0 : index
    %c0_9 = arith.constant 0 : index
    %c0_10 = arith.constant 0 : index
    %6 = vector.load %arg4[%c0_7, %c0_8, %c0_9, %c0_10] : memref<1x1x16x4xf32, #tpu.memory_space<vmem>>, vector<1x1x16x4xf32>
    %7 = vector.shape_cast %6 : vector<1x1x16x4xf32> to vector<1x16x4xf32>
    %cst_11 = arith.constant 0.000000e+00 : f32
    %8 = vector.broadcast %cst_11 : f32 to vector<1x16x4xf32>
    %9 = arith.select %5, %7, %8 : vector<1x16x4xf32>
    %c0_i32_12 = arith.constant 0 : i32
    %10 = arith.cmpi slt, %arg1, %c0_i32_12 : i32
    %c0_13 = arith.constant 0 : index
    %c0_14 = arith.constant 0 : index
    %c0_15 = arith.constant 0 : index
    %c0_16 = arith.constant 0 : index
    %11 = vector.load %arg5[%c0_13, %c0_14, %c0_15, %c0_16] : memref<1x1x16x4xf32, #tpu.memory_space<vmem>>, vector<1x1x16x4xf32>
    %12 = vector.shape_cast %11 : vector<1x1x16x4xf32> to vector<1x16x4xf32>
    %cst_17 = arith.constant 0.000000e+00 : f32
    %13 = vector.broadcast %cst_17 : f32 to vector<1x16x4xf32>
    %14 = arith.select %10, %12, %13 : vector<1x16x4xf32>
    %c0_18 = arith.constant 0 : index
    %c8_19 = arith.constant 8 : index
    %c0_20 = arith.constant 0 : index
    %15 = vector.load %arg7[%c0_18, %c8_19, %c0_20] : memref<18x32x4xf32, #tpu.memory_space<vmem>>, vector<1x16x4xf32>
    tpu.vector_store %arg7[%c0_18, %c8_19, %c0_20], %9 {strides = array<i32>} : memref<18x32x4xf32, #tpu.memory_space<vmem>>, vector<1x16x4xf32>,
    %c17 = arith.constant 17 : index
    %c8_21 = arith.constant 8 : index
    %c0_22 = arith.constant 0 : index
    %16 = vector.load %arg7[%c17, %c8_21, %c0_22] : memref<18x32x4xf32, #tpu.memory_space<vmem>>, vector<1x16x4xf32>
    tpu.vector_store %arg7[%c17, %c8_21, %c0_22], %14 {strides = array<i32>} : memref<18x32x4xf32, #tpu.memory_space<vmem>>, vector<1x16x4xf32>,
    %c0_23 = arith.constant 0 : index
    %c0_24 = arith.constant 0 : index
    %17 = vector.load %arg2[%c0_23, %c0_24] : memref<12x4xf32, #tpu.memory_space<vmem>>, vector<12x4xf32>
    %c0_25 = arith.constant 0 : index
    %c7 = arith.constant 7 : index
    %c0_26 = arith.constant 0 : index
    %18 = vector.load %arg7[%c0_25, %c7, %c0_26] : memref<18x32x4xf32, #tpu.memory_space<vmem>>, vector<16x16x4xf32>
    %19 = vector.extract_strided_slice %17 {offsets = [0, 0], sizes = [1, 4], strides = [1, 1]} : vector<12x4xf32> to vector<1x4xf32>
    %20 = vector.shape_cast %19 : vector<1x4xf32> to vector<4xf32>
    %21 = vector.shape_cast %20 : vector<4xf32> to vector<1x1x4xf32>
    %22 = vector.broadcast %21 : vector<1x1x4xf32> to vector<16x16x4xf32>
    %23 = arith.mulf %18, %22 : vector<16x16x4xf32>
    %c0_27 = arith.constant 0 : index
    %c8_28 = arith.constant 8 : index
    %c0_29 = arith.constant 0 : index
    %24 = vector.load %arg7[%c0_27, %c8_28, %c0_29] : memref<18x32x4xf32, #tpu.memory_space<vmem>>, vector<16x16x4xf32>
    %25 = vector.extract_strided_slice %17 {offsets = [1, 0], sizes = [1, 4], strides = [1, 1]} : vector<12x4xf32> to vector<1x4xf32>
    %26 = vector.shape_cast %25 : vector<1x4xf32> to vector<4xf32>
    %27 = vector.shape_cast %26 : vector<4xf32> to vector<1x1x4xf32>
    %28 = vector.broadcast %27 : vector<1x1x4xf32> to vector<16x16x4xf32>
    %29 = arith.mulf %24, %28 : vector<16x16x4xf32>
    %c0_30 = arith.constant 0 : index
    %c9 = arith.constant 9 : index
    %c0_31 = arith.constant 0 : index
    %30 = vector.load %arg7[%c0_30, %c9, %c0_31] : memref<18x32x4xf32, #tpu.memory_space<vmem>>, vector<16x16x4xf32>
    %31 = vector.extract_strided_slice %17 {offsets = [2, 0], sizes = [1, 4], strides = [1, 1]} : vector<12x4xf32> to vector<1x4xf32>
    %32 = vector.shape_cast %31 : vector<1x4xf32> to vector<4xf32>
    %33 = vector.shape_cast %32 : vector<4xf32> to vector<1x1x4xf32>
    %34 = vector.broadcast %33 : vector<1x1x4xf32> to vector<16x16x4xf32>
    %35 = arith.mulf %30, %34 : vector<16x16x4xf32>
    %c1_32 = arith.constant 1 : index
    %c7_33 = arith.constant 7 : index
    %c0_34 = arith.constant 0 : index
    %36 = vector.load %arg7[%c1_32, %c7_33, %c0_34] : memref<18x32x4xf32, #tpu.memory_space<vmem>>, vector<16x16x4xf32>
    %37 = vector.extract_strided_slice %17 {offsets = [3, 0], sizes = [1, 4], strides = [1, 1]} : vector<12x4xf32> to vector<1x4xf32>
    %38 = vector.shape_cast %37 : vector<1x4xf32> to vector<4xf32>
    %39 = vector.shape_cast %38 : vector<4xf32> to vector<1x1x4xf32>
    %40 = vector.broadcast %39 : vector<1x1x4xf32> to vector<16x16x4xf32>
    %41 = arith.mulf %36, %40 : vector<16x16x4xf32>
    %c1_35 = arith.constant 1 : index
    %c8_36 = arith.constant 8 : index
    %c0_37 = arith.constant 0 : index
    %42 = vector.load %arg7[%c1_35, %c8_36, %c0_37] : memref<18x32x4xf32, #tpu.memory_space<vmem>>, vector<16x16x4xf32>
    %43 = vector.extract_strided_slice %17 {offsets = [4, 0], sizes = [1, 4], strides = [1, 1]} : vector<12x4xf32> to vector<1x4xf32>
    %44 = vector.shape_cast %43 : vector<1x4xf32> to vector<4xf32>
    %45 = vector.shape_cast %44 : vector<4xf32> to vector<1x1x4xf32>
    %46 = vector.broadcast %45 : vector<1x1x4xf32> to vector<16x16x4xf32>
    %47 = arith.mulf %42, %46 : vector<16x16x4xf32>
    %c1_38 = arith.constant 1 : index
    %c9_39 = arith.constant 9 : index
    %c0_40 = arith.constant 0 : index
    %48 = vector.load %arg7[%c1_38, %c9_39, %c0_40] : memref<18x32x4xf32, #tpu.memory_space<vmem>>, vector<16x16x4xf32>
    %49 = vector.extract_strided_slice %17 {offsets = [5, 0], sizes = [1, 4], strides = [1, 1]} : vector<12x4xf32> to vector<1x4xf32>
    %50 = vector.shape_cast %49 : vector<1x4xf32> to vector<4xf32>
    %51 = vector.shape_cast %50 : vector<4xf32> to vector<1x1x4xf32>
    %52 = vector.broadcast %51 : vector<1x1x4xf32> to vector<16x16x4xf32>
    %53 = arith.mulf %48, %52 : vector<16x16x4xf32>
    %c2 = arith.constant 2 : index
    %c7_41 = arith.constant 7 : index
    %c0_42 = arith.constant 0 : index
    %54 = vector.load %arg7[%c2, %c7_41, %c0_42] : memref<18x32x4xf32, #tpu.memory_space<vmem>>, vector<16x16x4xf32>
    %55 = vector.extract_strided_slice %17 {offsets = [6, 0], sizes = [1, 4], strides = [1, 1]} : vector<12x4xf32> to vector<1x4xf32>
    %56 = vector.shape_cast %55 : vector<1x4xf32> to vector<4xf32>
    %57 = vector.shape_cast %56 : vector<4xf32> to vector<1x1x4xf32>
    %58 = vector.broadcast %57 : vector<1x1x4xf32> to vector<16x16x4xf32>
    %59 = arith.mulf %54, %58 : vector<16x16x4xf32>
    %c2_43 = arith.constant 2 : index
    %c8_44 = arith.constant 8 : index
    %c0_45 = arith.constant 0 : index
    %60 = vector.load %arg7[%c2_43, %c8_44, %c0_45] : memref<18x32x4xf32, #tpu.memory_space<vmem>>, vector<16x16x4xf32>
    %61 = vector.extract_strided_slice %17 {offsets = [7, 0], sizes = [1, 4], strides = [1, 1]} : vector<12x4xf32> to vector<1x4xf32>
    %62 = vector.shape_cast %61 : vector<1x4xf32> to vector<4xf32>
    %63 = vector.shape_cast %62 : vector<4xf32> to vector<1x1x4xf32>
    %64 = vector.broadcast %63 : vector<1x1x4xf32> to vector<16x16x4xf32>
    %65 = arith.mulf %60, %64 : vector<16x16x4xf32>
    %c2_46 = arith.constant 2 : index
    %c9_47 = arith.constant 9 : index
    %c0_48 = arith.constant 0 : index
    %66 = vector.load %arg7[%c2_46, %c9_47, %c0_48] : memref<18x32x4xf32, #tpu.memory_space<vmem>>, vector<16x16x4xf32>
    %67 = vector.extract_strided_slice %17 {offsets = [8, 0], sizes = [1, 4], strides = [1, 1]} : vector<12x4xf32> to vector<1x4xf32>
    %68 = vector.shape_cast %67 : vector<1x4xf32> to vector<4xf32>
    %69 = vector.shape_cast %68 : vector<4xf32> to vector<1x1x4xf32>
    %70 = vector.broadcast %69 : vector<1x1x4xf32> to vector<16x16x4xf32>
    %71 = arith.mulf %66, %70 : vector<16x16x4xf32>
    %72 = arith.addf %23, %29 : vector<16x16x4xf32>
    %73 = arith.addf %35, %41 : vector<16x16x4xf32>
    %74 = arith.addf %47, %53 : vector<16x16x4xf32>
    %75 = arith.addf %59, %65 : vector<16x16x4xf32>
    %76 = arith.addf %72, %73 : vector<16x16x4xf32>
    %77 = arith.addf %74, %75 : vector<16x16x4xf32>
    %78 = arith.addf %76, %77 : vector<16x16x4xf32>
    %79 = arith.addf %78, %71 : vector<16x16x4xf32>
    %80 = vector.extract_strided_slice %17 {offsets = [9, 0], sizes = [1, 4], strides = [1, 1]} : vector<12x4xf32> to vector<1x4xf32>
    %81 = vector.shape_cast %80 : vector<1x4xf32> to vector<4xf32>
    %82 = vector.shape_cast %81 : vector<4xf32> to vector<1x1x4xf32>
    %83 = vector.broadcast %82 : vector<1x1x4xf32> to vector<16x16x4xf32>
    %84 = arith.addf %79, %83 : vector<16x16x4xf32>
    %85 = arith.mulf %84, %84 : vector<16x16x4xf32>
    %86 = arith.mulf %84, %85 : vector<16x16x4xf32>
    %cst_49 = arith.constant 4.471500e-02 : f32
    %87 = vector.broadcast %cst_49 : f32 to vector<16x16x4xf32>
    %88 = arith.mulf %87, %86 : vector<16x16x4xf32>
    %89 = arith.addf %84, %88 : vector<16x16x4xf32>
    %cst_50 = arith.constant 0.797884583 : f32
    %90 = vector.broadcast %cst_50 : f32 to vector<16x16x4xf32>
    %91 = arith.mulf %90, %89 : vector<16x16x4xf32>
    %92 = math.tanh %91 : vector<16x16x4xf32>
    %cst_51 = arith.constant 1.000000e+00 : f32
    %93 = vector.broadcast %cst_51 : f32 to vector<16x16x4xf32>
    %94 = arith.addf %93, %92 : vector<16x16x4xf32>
    %cst_52 = arith.constant 5.000000e-01 : f32
    %95 = vector.broadcast %cst_52 : f32 to vector<16x16x4xf32>
    %96 = arith.mulf %95, %94 : vector<16x16x4xf32>
    %97 = arith.mulf %84, %96 : vector<16x16x4xf32>
    %98 = vector.extract_strided_slice %17 {offsets = [10, 0], sizes = [1, 4], strides = [1, 1]} : vector<12x4xf32> to vector<1x4xf32>
    %99 = vector.shape_cast %98 : vector<1x4xf32> to vector<4xf32>
    %100 = vector.shape_cast %99 : vector<4xf32> to vector<1x1x4xf32>
    %101 = vector.broadcast %100 : vector<1x1x4xf32> to vector<16x16x4xf32>
    %102 = arith.mulf %97, %101 : vector<16x16x4xf32>
    %103 = vector.extract_strided_slice %17 {offsets = [11, 0], sizes = [1, 4], strides = [1, 1]} : vector<12x4xf32> to vector<1x4xf32>
    %104 = vector.shape_cast %103 : vector<1x4xf32> to vector<4xf32>
    %105 = vector.shape_cast %104 : vector<4xf32> to vector<1x1x4xf32>
    %106 = vector.broadcast %105 : vector<1x1x4xf32> to vector<16x16x4xf32>
    %107 = arith.addf %102, %106 : vector<16x16x4xf32>
    %108 = arith.addf %107, %1 : vector<16x16x4xf32>
    %c0_53 = arith.constant 0 : index
    %c0_54 = arith.constant 0 : index
    %c0_55 = arith.constant 0 : index
    %c0_56 = arith.constant 0 : index
    %109 = vector.load %arg6[%c0_53, %c0_54, %c0_55, %c0_56] : memref<1x16x16x4xf32, #tpu.memory_space<vmem>>, vector<1x16x16x4xf32>
    %110 = vector.shape_cast %109 : vector<1x16x16x4xf32> to vector<16x16x4xf32>
    %111 = vector.shape_cast %108 : vector<16x16x4xf32> to vector<1x16x16x4xf32>
    tpu.vector_store %arg6[%c0_53, %c0_54, %c0_55, %c0_56], %111 {strides = array<i32>} : memref<1x16x16x4xf32, #tpu.memory_space<vmem>>, vector<1x16x16x4xf32>,
    return
  }
  func.func @transform_0(%arg0: i32, %arg1: i32) -> (i32, i32) {
    %c0_i32 = arith.constant 0 : i32
    %c0_i32_0 = arith.constant 0 : i32
    %c0_i32_1 = arith.constant 0 : i32
    return %c0_i32, %c0_i32_0 : i32, i32
  }
  func.func @transform_1(%arg0: i32, %arg1: i32) -> (i32, i32, i32, i32) {
    %c0_i32 = arith.constant 0 : i32
    %c0_i32_0 = arith.constant 0 : i32
    %c0_i32_1 = arith.constant 0 : i32
    return %arg0, %arg1, %c0_i32, %c0_i32_0 : i32, i32, i32, i32
  }
  func.func @transform_2(%arg0: i32, %arg1: i32) -> (i32, i32, i32, i32) {
    %c16_i32 = arith.constant 16 : i32
    %0 = arith.muli %arg1, %c16_i32 : i32
    %c1_i32 = arith.constant 1 : i32
    %1 = arith.subi %0, %c1_i32 : i32
    %c0_i32 = arith.constant 0 : i32
    %2 = arith.maxsi %1, %c0_i32 : i32
    %c0_i32_0 = arith.constant 0 : i32
    %c0_i32_1 = arith.constant 0 : i32
    %c0_i32_2 = arith.constant 0 : i32
    return %arg0, %2, %c0_i32_0, %c0_i32_1 : i32, i32, i32, i32
  }
  func.func @transform_3(%arg0: i32, %arg1: i32) -> (i32, i32, i32, i32) {
    %c1_i32 = arith.constant 1 : i32
    %0 = arith.addi %arg1, %c1_i32 : i32
    %c16_i32 = arith.constant 16 : i32
    %1 = arith.muli %0, %c16_i32 : i32
    %c15_i32 = arith.constant 15 : i32
    %2 = arith.minsi %1, %c15_i32 : i32
    %c0_i32 = arith.constant 0 : i32
    %c0_i32_0 = arith.constant 0 : i32
    %c0_i32_1 = arith.constant 0 : i32
    return %arg0, %2, %c0_i32, %c0_i32_0 : i32, i32, i32, i32
  }
  func.func @transform_4(%arg0: i32, %arg1: i32) -> (i32, i32, i32, i32) {
    %c0_i32 = arith.constant 0 : i32
    %c0_i32_0 = arith.constant 0 : i32
    %c0_i32_1 = arith.constant 0 : i32
    return %arg0, %arg1, %c0_i32, %c0_i32_0 : i32, i32, i32, i32
  }
}

</mosaic_0001>

<llo_original>
// kernel: tpu_custom_call.1
$region0: #{tpu_custom_call.1}
  #allocation0 [shape = 'u32[]', space=smem, size = 0x4, offset = 0x4, fixed_abs, tag = 'smem constant byte address 0x4 - core index']
  #allocation1 [shape = 'u32[72,128]{1,0:T(1,128)}', space=vmem, size = 0x9000, scoped, tag = 'internal scratch']
  #allocation2 [shape = 'f32[18,32,4]{2,1,0:T(8,128)}', space=vmem, size = 0x48000, scoped, tag = 'scratch operand']
  %s0 = inlined_call_operand.vmem [shape: f32[12,4], index: 0, kind: input, shape index: {}]
  %s1 = inlined_call_operand.vmem [shape: f32[2,16,16,4], index: 1, kind: input, shape index: {}]
  %s2 = inlined_call_operand.vmem [shape: f32[2,16,16,4], index: 2, kind: input, shape index: {}]
  %s3 = inlined_call_operand.vmem [shape: f32[2,16,16,4], index: 3, kind: input, shape index: {}]
  %s4 = inlined_call_operand.vmem [shape: f32[2,16,16,4], index: 4, kind: output, shape index: {}]
  %s5 = sld [smem:[#allocation0]]
  $region49: #{tpu_custom_call.1} parent=0
    _
  %s7 = ssub.s32 1, %s5
  %s8 = scalar_select 0, %s7, %s5
  loop: start=0, step=1, limit=4
  $region2: #{tpu_custom_call.1} parent=0 // loop_pre_header
    _
  $region3: #{tpu_custom_call.1} parent=0 // loop_header
    %s10 = sphi 0, %s14
    %p11 = scmp.ge.s32.totalorder %s10, 4
    %s17 = sphi 0, %s29
    %s18 = sphi 0, %s25
    %s19 = sphi 0, %s17
    %s20 = sphi 0, %s18
    %s21 = sphi 0, %s19
    %s22 = sphi 0, %s20
    %s30 = sphi 0, %s30
    %s32 = sphi 0, %s30
    %s33 = sphi 0, %s32
    %s47 = sphi 0, %s33
    %s55 = sphi 0, %s57
    %s58 = sphi 0, %s55
    %s59 = sphi 0, %s58
    %s75 = sphi 0, %s59
    %s91 = sphi 0, %s93
    %s94 = sphi 0, %s91
    %s95 = sphi 0, %s94
    %s111 = sphi 0, %s95
    %s127 = sphi 0, %s129
    %s130 = sphi 0, %s127
    %s131 = sphi 0, %s130
    %s147 = sphi 0, %s131
    %s155 = sphi 0, %s157
    %s158 = sphi 0, %s155
    %s159 = sphi 0, %s158
    %s175 = sphi 0, %s159
  $region4: #{tpu_custom_call.1} parent=0 // loop_header_branch
    %13 = sbr.rel (%p11) target = $region8
  $region5: #{tpu_custom_call.1} parent=0 // loop_body
    %s15 = ssub.s32 %s10, 1
    %s16 = ssub.s32 %s10, 2
    %s23 = sadd.s32 1, %s18
    %p24 = scmp.ge.s32.totalorder %s23, 1
    %s25 = scalar_select %p24, 0, %s23
    %s26 = sadd.s32 1, %s17
    %s27 = scalar_select %p24, %s26, %s17
    %p28 = scmp.ge.s32.totalorder %s27, 2
    %s29 = scalar_select %p28, 0, %s27
    %s31 = sadd.s32 %s30, 1
    %p34 = scmp.eq.s32.totalorder %s10, 1
    %p35 = scmp.ne.s32.totalorder %s30, %s32
    %p36 = scmp.eq.s32.totalorder %s10, 0
    %p37 = por %p35, %p36
    %p38 = scmp.ne.s32.totalorder %s30, %s32
    %p39 = scmp.eq.s32.totalorder %s15, 1
    %p40 = por %p38, %p39
    %p41 = scmp.ne.s32.totalorder %s32, %s33
    %p42 = scmp.eq.s32.totalorder %s15, 0
    %p43 = por %p41, %p42
    %p44 = scmp.ne.s32.totalorder %s32, %s33
    %p45 = scmp.eq.s32.totalorder %s16, 1
    %p46 = por %p44, %p45
    %p48 = scmp.ne.s32.totalorder %s33, %s47
    %p49 = scmp.eq.s32.totalorder %s16, 0
    %p50 = por %p48, %p49
    %s51 = ssub.s32 %s17, %s29
    %s52 = ssub.s32 %s18, %s25
    %s53 = sor.u32 %s51, %s52
    %p54 = scmp.eq.s32.totalorder %s53, 0
    %s56 = sadd.s32 %s55, 1
    %s57 = scalar_select %p54, %s55, %s56
    %p60 = pneg %p54
    %p61 = scmp.eq.s32.totalorder %s10, 1
    %p62 = por %p60, %p61
    %p63 = scmp.ne.s32.totalorder %s55, %s58
    %p64 = scmp.eq.s32.totalorder %s10, 0
    %p65 = por %p63, %p64
    %p66 = scmp.ne.s32.totalorder %s55, %s58
    %p67 = scmp.eq.s32.totalorder %s15, 1
    %p68 = por %p66, %p67
    %p69 = scmp.ne.s32.totalorder %s58, %s59
    %p70 = scmp.eq.s32.totalorder %s15, 0
    %p71 = por %p69, %p70
    %p72 = scmp.ne.s32.totalorder %s58, %s59
    %p73 = scmp.eq.s32.totalorder %s16, 1
    %p74 = por %p72, %p73
    %p76 = scmp.ne.s32.totalorder %s59, %s75
    %p77 = scmp.eq.s32.totalorder %s16, 0
    %p78 = por %p76, %p77
    %s79 = smul.u32 %s18, 16
    %s80 = ssub.s32 %s79, 1
    %p81 = scmp.gt.s32.totalorder %s80, 0
    %s82 = scalar_select %p81, %s80, 0
    %s83 = smul.u32 %s25, 16
    %s84 = ssub.s32 %s83, 1
    %p85 = scmp.gt.s32.totalorder %s84, 0
    %s86 = scalar_select %p85, %s84, 0
    %s87 = ssub.s32 %s17, %s29
    %s88 = ssub.s32 %s82, %s86
    %s89 = sor.u32 %s87, %s88
    %p90 = scmp.eq.s32.totalorder %s89, 0
    %s92 = sadd.s32 %s91, 1
    %s93 = scalar_select %p90, %s91, %s92
    %p96 = pneg %p90
    %p97 = scmp.eq.s32.totalorder %s10, 1
    %p98 = por %p96, %p97
    %p99 = scmp.ne.s32.totalorder %s91, %s94
    %p100 = scmp.eq.s32.totalorder %s10, 0
    %p101 = por %p99, %p100
    %p102 = scmp.ne.s32.totalorder %s91, %s94
    %p103 = scmp.eq.s32.totalorder %s15, 1
    %p104 = por %p102, %p103
    %p105 = scmp.ne.s32.totalorder %s94, %s95
    %p106 = scmp.eq.s32.totalorder %s15, 0
    %p107 = por %p105, %p106
    %p108 = scmp.ne.s32.totalorder %s94, %s95
    %p109 = scmp.eq.s32.totalorder %s16, 1
    %p110 = por %p108, %p109
    %p112 = scmp.ne.s32.totalorder %s95, %s111
    %p113 = scmp.eq.s32.totalorder %s16, 0
    %p114 = por %p112, %p113
    %s115 = sadd.s32 %s18, 1
    %s116 = smul.u32 %s115, 16
    %p117 = scmp.lt.s32.totalorder %s116, 15
    %s118 = scalar_select %p117, %s116, 15
    %s119 = sadd.s32 %s25, 1
    %s120 = smul.u32 %s119, 16
    %p121 = scmp.lt.s32.totalorder %s120, 15
    %s122 = scalar_select %p121, %s120, 15
    %s123 = ssub.s32 %s17, %s29
    %s124 = ssub.s32 %s118, %s122
    %s125 = sor.u32 %s123, %s124
    %p126 = scmp.eq.s32.totalorder %s125, 0
    %s128 = sadd.s32 %s127, 1
    %s129 = scalar_select %p126, %s127, %s128
    %p132 = pneg %p126
    %p133 = scmp.eq.s32.totalorder %s10, 1
    %p134 = por %p132, %p133
    %p135 = scmp.ne.s32.totalorder %s127, %s130
    %p136 = scmp.eq.s32.totalorder %s10, 0
    %p137 = por %p135, %p136
    %p138 = scmp.ne.s32.totalorder %s127, %s130
    %p139 = scmp.eq.s32.totalorder %s15, 1
    %p140 = por %p138, %p139
    %p141 = scmp.ne.s32.totalorder %s130, %s131
    %p142 = scmp.eq.s32.totalorder %s15, 0
    %p143 = por %p141, %p142
    %p144 = scmp.ne.s32.totalorder %s130, %s131
    %p145 = scmp.eq.s32.totalorder %s16, 1
    %p146 = por %p144, %p145
    %p148 = scmp.ne.s32.totalorder %s131, %s147
    %p149 = scmp.eq.s32.totalorder %s16, 0
    %p150 = por %p148, %p149
    %s151 = ssub.s32 %s17, %s29
    %s152 = ssub.s32 %s18, %s25
    %s153 = sor.u32 %s151, %s152
    %p154 = scmp.eq.s32.totalorder %s153, 0
    %s156 = sadd.s32 %s155, 1
    %s157 = scalar_select %p154, %s155, %s156
    %p160 = pneg %p154
    %p161 = scmp.eq.s32.totalorder %s10, 1
    %p162 = por %p160, %p161
    %p163 = scmp.ne.s32.totalorder %s155, %s158
    %p164 = scmp.eq.s32.totalorder %s10, 0
    %p165 = por %p163, %p164
    %p166 = scmp.ne.s32.totalorder %s155, %s158
    %p167 = scmp.eq.s32.totalorder %s15, 1
    %p168 = por %p166, %p167
    %p169 = scmp.ne.s32.totalorder %s158, %s159
    %p170 = scmp.eq.s32.totalorder %s15, 0
    %p171 = por %p169, %p170
    %p172 = scmp.ne.s32.totalorder %s158, %s159
    %p173 = scmp.eq.s32.totalorder %s16, 1
    %p174 = por %p172, %p173
    %p176 = scmp.ne.s32.totalorder %s159, %s175
    %p177 = scmp.eq.s32.totalorder %s16, 0
    %p178 = por %p176, %p177
    %p179 = scmp.le.s32.totalorder 1, %s10
    %p180 = scmp.lt.s32.totalorder %s10, 3
    %p181 = pnand %p179, %p180
    %p182 = pneg %p181
    // Predicated region
    $region9: #{tpu_custom_call.1} parent=5 // pred_check
      _
    $region10: #{tpu_custom_call.1} parent=5 // pred_check_branch
      %184 = sbr.rel (%p181) target = $region12
    $region11: #{tpu_custom_call.1} parent=5 // pred_region
      %s185 = ssub.s32 %s10, 1
      // Predicated region
      $region13: #{tpu_custom_call.1} parent=11 // pred_check
        %p186 = pneg %p43
      $region14: #{tpu_custom_call.1} parent=11 // pred_check_branch
        %188 = sbr.rel (%p186) target = $region16
      $region15: #{tpu_custom_call.1} parent=11 // pred_region
        _
      $region16: #{tpu_custom_call.1} parent=11 // pred_fallthru
        _
    $region12: #{tpu_custom_call.1} parent=5 // pred_fallthru
      _
    %p189 = scmp.lt.s32.totalorder %s10, 2
    // Predicated region
    $region17: #{tpu_custom_call.1} parent=5 // pred_check
      %p190 = pneg %p189
    $region18: #{tpu_custom_call.1} parent=5 // pred_check_branch
      %192 = sbr.rel (%p190) target = $region20
    $region19: #{tpu_custom_call.1} parent=5 // pred_region
      // Predicated region
      $region21: #{tpu_custom_call.1} parent=19 // pred_check
        %p193 = pneg %p65
      $region22: #{tpu_custom_call.1} parent=19 // pred_check_branch
        %195 = sbr.rel (%p193) target = $region24
      $region23: #{tpu_custom_call.1} parent=19 // pred_region
        %s196 = smul.u32 16, %s18
        %p197 = scmp.lt.s32.totalorder %s17, 1
        %s198 = scalar_select %p197, %s17, 1
        %p199 = scmp.lt.s32.totalorder %s196, 15
        %s200 = scalar_select %p199, %s196, 15
        %s201 = smul.addr %s200, 2
        %s202 = smul.addr %s198, 32
        %s203 = sadd.s32 %s201, %s202
        %s204 = smul.addr %s203, 8
        %s205 = scalar_lea.vmem %s1, %s204
        %s206 = smul.u32 16, %s18
      $region24: #{tpu_custom_call.1} parent=19 // pred_fallthru
        _
      // Predicated region
      $region25: #{tpu_custom_call.1} parent=19 // pred_check
        %p207 = pneg %p101
      $region26: #{tpu_custom_call.1} parent=19 // pred_check_branch
        %209 = sbr.rel (%p207) target = $region28
      $region27: #{tpu_custom_call.1} parent=19 // pred_region
        %s210 = smul.u32 %s18, 16
        %s211 = ssub.s32 %s210, 1
        %p212 = scmp.gt.s32.totalorder %s211, 0
        %s213 = scalar_select %p212, %s211, 0
        %p214 = scmp.lt.s32.totalorder %s17, 1
        %s215 = scalar_select %p214, %s17, 1
        %p216 = scmp.lt.s32.totalorder %s213, 15
        %s217 = scalar_select %p216, %s213, 15
        %s218 = smul.addr %s217, 2
        %s219 = smul.addr %s215, 32
        %s220 = sadd.s32 %s218, %s219
        %s221 = smul.addr %s220, 8
        %s222 = scalar_lea.vmem %s2, %s221
        %s223 = smul.u32 %s18, 16
        %s224 = ssub.s32 %s223, 1
        %p225 = scmp.gt.s32.totalorder %s224, 0
        %s226 = scalar_select %p225, %s224, 0
      $region28: #{tpu_custom_call.1} parent=19 // pred_fallthru
        _
      // Predicated region
      $region29: #{tpu_custom_call.1} parent=19 // pred_check
        %p227 = pneg %p137
      $region30: #{tpu_custom_call.1} parent=19 // pred_check_branch
        %229 = sbr.rel (%p227) target = $region32
      $region31: #{tpu_custom_call.1} parent=19 // pred_region
        %s230 = sadd.s32 %s18, 1
        %s231 = smul.u32 %s230, 16
        %p232 = scmp.lt.s32.totalorder %s231, 15
        %s233 = scalar_select %p232, %s231, 15
        %p234 = scmp.lt.s32.totalorder %s17, 1
        %s235 = scalar_select %p234, %s17, 1
        %p236 = scmp.lt.s32.totalorder %s233, 15
        %s237 = scalar_select %p236, %s233, 15
        %s238 = smul.addr %s237, 2
        %s239 = smul.addr %s235, 32
        %s240 = sadd.s32 %s238, %s239
        %s241 = smul.addr %s240, 8
        %s242 = scalar_lea.vmem %s3, %s241
        %s243 = sadd.s32 %s18, 1
        %s244 = smul.u32 %s243, 16
        %p245 = scmp.lt.s32.totalorder %s244, 15
        %s246 = scalar_select %p245, %s244, 15
      $region32: #{tpu_custom_call.1} parent=19 // pred_fallthru
        _
    $region20: #{tpu_custom_call.1} parent=5 // pred_fallthru
      _
    %p247 = scmp.le.s32.totalorder 1, %s10
    %p248 = scmp.lt.s32.totalorder %s10, 3
    %p249 = pnand %p247, %p248
    %p250 = pneg %p249
    // Predicated region
    $region33: #{tpu_custom_call.1} parent=5 // pred_check
      _
    $region34: #{tpu_custom_call.1} parent=5 // pred_check_branch
      %252 = sbr.rel (%p249) target = $region36
    $region35: #{tpu_custom_call.1} parent=5 // pred_region
      %s253 = ssub.s32 %s10, 1
      %p254 = pneg %p43
      %p255 = pneg %p40
      %s256 = smul.u32 16, %s20
      %p257 = scmp.lt.s32.totalorder %s19, 1
      %s258 = scalar_select %p257, %s19, 1
      %p259 = scmp.lt.s32.totalorder %s256, 15
      %s260 = scalar_select %p259, %s256, 15
      %s261 = smul.addr %s260, 2
      %s262 = smul.addr %s258, 32
      %s263 = sadd.s32 %s261, %s262
      %s264 = smul.addr %s263, 8
      %s265 = scalar_lea.vmem %s1, %s264
      %p266 = pneg %p71
      %p267 = pneg %p68
      %s268 = smul.u32 %s20, 16
      %s269 = ssub.s32 %s268, 1
      %p270 = scmp.gt.s32.totalorder %s269, 0
      %s271 = scalar_select %p270, %s269, 0
      %p272 = scmp.lt.s32.totalorder %s19, 1
      %s273 = scalar_select %p272, %s19, 1
      %p274 = scmp.lt.s32.totalorder %s271, 15
      %s275 = scalar_select %p274, %s271, 15
      %s276 = smul.addr %s275, 2
      %s277 = smul.addr %s273, 32
      %s278 = sadd.s32 %s276, %s277
      %s279 = smul.addr %s278, 8
      %s280 = scalar_lea.vmem %s2, %s279
      %p281 = pneg %p107
      %p282 = pneg %p104
      %s283 = sadd.s32 %s20, 1
      %s284 = smul.u32 %s283, 16
      %p285 = scmp.lt.s32.totalorder %s284, 15
      %s286 = scalar_select %p285, %s284, 15
      %p287 = scmp.lt.s32.totalorder %s19, 1
      %s288 = scalar_select %p287, %s19, 1
      %p289 = scmp.lt.s32.totalorder %s286, 15
      %s290 = scalar_select %p289, %s286, 15
      %s291 = smul.addr %s290, 2
      %s292 = smul.addr %s288, 32
      %s293 = sadd.s32 %s291, %s292
      %s294 = smul.addr %s293, 8
      %s295 = scalar_lea.vmem %s3, %s294
      %p296 = pneg %p143
      %p297 = pneg %p140
      %p298 = pneg %p171
      %p299 = pneg %p168
      %s300 = smul.u32 16, %s20
      %p301 = scmp.lt.s32.totalorder %s19, 1
      %s302 = scalar_select %p301, %s19, 1
      %p303 = scmp.lt.s32.totalorder %s300, 15
      %s304 = scalar_select %p303, %s300, 15
      %s305 = smul.addr %s304, 2
      %s306 = smul.addr %s302, 32
      %s307 = sadd.s32 %s305, %s306
      %s308 = smul.addr %s307, 8
      %s309 = scalar_lea.vmem %s4, %s308
      %s310 = smul.u32 16, %s20
      %p311 = scmp.lt.s32.totalorder %s19, 1
      %s312 = scalar_select %p311, %s19, 1
      %p313 = scmp.lt.s32.totalorder %s310, 15
      %s314 = scalar_select %p313, %s310, 15
      %s315 = smul.addr %s314, 2
      %s316 = smul.addr %s312, 32
      %s317 = sadd.s32 %s315, %s316
      %s318 = smul.addr %s317, 8
      %s319 = scalar_lea.vmem %s1, %s318
      %s320 = smul.u32 16, %s20
      %s321 = smul.u32 %s20, 16
      %s322 = ssub.s32 %s321, 1
      %p323 = scmp.gt.s32.totalorder %s322, 0
      %s324 = scalar_select %p323, %s322, 0
      %p325 = scmp.lt.s32.totalorder %s19, 1
      %s326 = scalar_select %p325, %s19, 1
      %p327 = scmp.lt.s32.totalorder %s324, 15
      %s328 = scalar_select %p327, %s324, 15
      %s329 = smul.addr %s328, 2
      %s330 = smul.addr %s326, 32
      %s331 = sadd.s32 %s329, %s330
      %s332 = smul.addr %s331, 8
      %s333 = scalar_lea.vmem %s2, %s332
      %s334 = smul.u32 %s20, 16
      %s335 = ssub.s32 %s334, 1
      %p336 = scmp.gt.s32.totalorder %s335, 0
      %s337 = scalar_select %p336, %s335, 0
      %s338 = sadd.s32 %s20, 1
      %s339 = smul.u32 %s338, 16
      %p340 = scmp.lt.s32.totalorder %s339, 15
      %s341 = scalar_select %p340, %s339, 15
      %p342 = scmp.lt.s32.totalorder %s19, 1
      %s343 = scalar_select %p342, %s19, 1
      %p344 = scmp.lt.s32.totalorder %s341, 15
      %s345 = scalar_select %p344, %s341, 15
      %s346 = smul.addr %s345, 2
      %s347 = smul.addr %s343, 32
      %s348 = sadd.s32 %s346, %s347
      %s349 = smul.addr %s348, 8
      %s350 = scalar_lea.vmem %s3, %s349
      %s351 = sadd.s32 %s20, 1
      %s352 = smul.u32 %s351, 16
      %p353 = scmp.lt.s32.totalorder %s352, 15
      %s354 = scalar_select %p353, %s352, 15
      %s355 = smul.u32 16, %s20
      %p356 = scmp.lt.s32.totalorder %s19, 1
      %s357 = scalar_select %p356, %s19, 1
      %p358 = scmp.lt.s32.totalorder %s355, 15
      %s359 = scalar_select %p358, %s355, 15
      %s360 = smul.addr %s359, 2
      %s361 = smul.addr %s357, 32
      %s362 = sadd.s32 %s360, %s361
      %s363 = smul.addr %s362, 8
      %s364 = scalar_lea.vmem %s4, %s363
      %s365 = smul.u32 16, %s20
      %v366 = vld [vmem:[%s319] sm:$0xff]
      %v367 = vld [vmem:[%s319 + $0x8] sm:$0xff]
      %v368 = vld [vmem:[%s319 + $0x10] sm:$0xff]
      %v369 = vld [vmem:[%s319 + $0x18] sm:$0xff]
      %v370 = vld [vmem:[%s319 + $0x20] sm:$0xff]
      %v371 = vld [vmem:[%s319 + $0x28] sm:$0xff]
      %v372 = vld [vmem:[%s319 + $0x30] sm:$0xff]
      %v373 = vld [vmem:[%s319 + $0x38] sm:$0xff]
      %v374 = vld [vmem:[%s319 + $0x40] sm:$0xff]
      %v375 = vld [vmem:[%s319 + $0x48] sm:$0xff]
      %v376 = vld [vmem:[%s319 + $0x50] sm:$0xff]
      %v377 = vld [vmem:[%s319 + $0x58] sm:$0xff]
      %v378 = vld [vmem:[%s319 + $0x60] sm:$0xff]
      %v379 = vld [vmem:[%s319 + $0x68] sm:$0xff]
      %v380 = vld [vmem:[%s319 + $0x70] sm:$0xff]
      %v381 = vld [vmem:[%s319 + $0x78] sm:$0xff]
      %v382 = vld [vmem:[%s319 + $0x80] sm:$0xff]
      %v383 = vld [vmem:[%s319 + $0x88] sm:$0xff]
      %v384 = vld [vmem:[%s319 + $0x90] sm:$0xff]
      %v385 = vld [vmem:[%s319 + $0x98] sm:$0xff]
      %v386 = vld [vmem:[%s319 + $0xa0] sm:$0xff]
      %v387 = vld [vmem:[%s319 + $0xa8] sm:$0xff]
      %v388 = vld [vmem:[%s319 + $0xb0] sm:$0xff]
      %v389 = vld [vmem:[%s319 + $0xb8] sm:$0xff]
      %v390 = vld [vmem:[%s319 + $0xc0] sm:$0xff]
      %v391 = vld [vmem:[%s319 + $0xc8] sm:$0xff]
      %v392 = vld [vmem:[%s319 + $0xd0] sm:$0xff]
      %v393 = vld [vmem:[%s319 + $0xd8] sm:$0xff]
      %v394 = vld [vmem:[%s319 + $0xe0] sm:$0xff]
      %v395 = vld [vmem:[%s319 + $0xe8] sm:$0xff]
      %v396 = vld [vmem:[%s319 + $0xf0] sm:$0xff]
      %v397 = vld [vmem:[%s319 + $0xf8] sm:$0xff]
      %vm398 = vcmask 31744
      %399 = vst.msk [vmem:[#allocation2] sm:$0xff] %vm398, 0.0
      %400 = vst.msk [vmem:[#allocation2 + $0x8] sm:$0xff] %vm398, 0.0
      %401 = vst.msk [vmem:[#allocation2 + $0x10] sm:$0xff] %vm398, 0.0
      %402 = vst.msk [vmem:[#allocation2 + $0x18] sm:$0xff] %vm398, 0.0
      %403 = vst.msk [vmem:[#allocation2 + $0x20] sm:$0xff] %vm398, 0.0
      %404 = vst.msk [vmem:[#allocation2 + $0x28] sm:$0xff] %vm398, 0.0
      %405 = vst.msk [vmem:[#allocation2 + $0x30] sm:$0xff] %vm398, 0.0
      %406 = vst.msk [vmem:[#allocation2 + $0x38] sm:$0xff] %vm398, 0.0
      %407 = vst.msk [vmem:[#allocation2 + $0x40] sm:$0xff] %vm398, 0.0
      %408 = vst.msk [vmem:[#allocation2 + $0x48] sm:$0xff] %vm398, 0.0
      %409 = vst.msk [vmem:[#allocation2 + $0x50] sm:$0xff] %vm398, 0.0
      %410 = vst.msk [vmem:[#allocation2 + $0x58] sm:$0xff] %vm398, 0.0
      %411 = vst.msk [vmem:[#allocation2 + $0x60] sm:$0xff] %vm398, 0.0
      %412 = vst.msk [vmem:[#allocation2 + $0x68] sm:$0xff] %vm398, 0.0
      %413 = vst.msk [vmem:[#allocation2 + $0x70] sm:$0xff] %vm398, 0.0
      %414 = vst.msk [vmem:[#allocation2 + $0x78] sm:$0xff] %vm398, 0.0
      %415 = vst.msk [vmem:[#allocation2 + $0x80] sm:$0xff] %vm398, 0.0
      %416 = vst.msk [vmem:[#allocation2 + $0x88] sm:$0xff] %vm398, 0.0
      %417 = vst.msk [vmem:[#allocation2 + $0x90] sm:$0xff] %vm398, 0.0
      %418 = vst.msk [vmem:[#allocation2 + $0x98] sm:$0xff] %vm398, 0.0
      %419 = vst.msk [vmem:[#allocation2 + $0xa0] sm:$0xff] %vm398, 0.0
      %420 = vst.msk [vmem:[#allocation2 + $0xa8] sm:$0xff] %vm398, 0.0
      %421 = vst.msk [vmem:[#allocation2 + $0xb0] sm:$0xff] %vm398, 0.0
      %422 = vst.msk [vmem:[#allocation2 + $0xb8] sm:$0xff] %vm398, 0.0
      %423 = vst.msk [vmem:[#allocation2 + $0xc0] sm:$0xff] %vm398, 0.0
      %424 = vst.msk [vmem:[#allocation2 + $0xc8] sm:$0xff] %vm398, 0.0
      %425 = vst.msk [vmem:[#allocation2 + $0xd0] sm:$0xff] %vm398, 0.0
      %426 = vst.msk [vmem:[#allocation2 + $0xd8] sm:$0xff] %vm398, 0.0
      %427 = vst.msk [vmem:[#allocation2 + $0xe0] sm:$0xff] %vm398, 0.0
      %428 = vst.msk [vmem:[#allocation2 + $0xe8] sm:$0xff] %vm398, 0.0
      %429 = vst.msk [vmem:[#allocation2 + $0xf0] sm:$0xff] %vm398, 0.0
      %430 = vst.msk [vmem:[#allocation2 + $0xf8] sm:$0xff] %vm398, 0.0
      %431 = vst.msk [vmem:[#allocation2 + $0x100] sm:$0xff] %vm398, 0.0
      %432 = vst.msk [vmem:[#allocation2 + $0x108] sm:$0xff] %vm398, 0.0
      %433 = vst.msk [vmem:[#allocation2 + $0x110] sm:$0xff] %vm398, 0.0
      %434 = vst.msk [vmem:[#allocation2 + $0x118] sm:$0xff] %vm398, 0.0
      %435 = vst.msk [vmem:[#allocation2 + $0x120] sm:$0xff] %vm398, 0.0
      %436 = vst.msk [vmem:[#allocation2 + $0x128] sm:$0xff] %vm398, 0.0
      %437 = vst.msk [vmem:[#allocation2 + $0x130] sm:$0xff] %vm398, 0.0
      %438 = vst.msk [vmem:[#allocation2 + $0x138] sm:$0xff] %vm398, 0.0
      %439 = vst.msk [vmem:[#allocation2 + $0x140] sm:$0xff] %vm398, 0.0
      %440 = vst.msk [vmem:[#allocation2 + $0x148] sm:$0xff] %vm398, 0.0
      %441 = vst.msk [vmem:[#allocation2 + $0x150] sm:$0xff] %vm398, 0.0
      %442 = vst.msk [vmem:[#allocation2 + $0x158] sm:$0xff] %vm398, 0.0
      %443 = vst.msk [vmem:[#allocation2 + $0x160] sm:$0xff] %vm398, 0.0
      %444 = vst.msk [vmem:[#allocation2 + $0x168] sm:$0xff] %vm398, 0.0
      %445 = vst.msk [vmem:[#allocation2 + $0x170] sm:$0xff] %vm398, 0.0
      %446 = vst.msk [vmem:[#allocation2 + $0x178] sm:$0xff] %vm398, 0.0
      %447 = vst.msk [vmem:[#allocation2 + $0x180] sm:$0xff] %vm398, 0.0
      %448 = vst.msk [vmem:[#allocation2 + $0x188] sm:$0xff] %vm398, 0.0
      %449 = vst.msk [vmem:[#allocation2 + $0x190] sm:$0xff] %vm398, 0.0
      %450 = vst.msk [vmem:[#allocation2 + $0x198] sm:$0xff] %vm398, 0.0
      %451 = vst.msk [vmem:[#allocation2 + $0x1a0] sm:$0xff] %vm398, 0.0
      %452 = vst.msk [vmem:[#allocation2 + $0x1a8] sm:$0xff] %vm398, 0.0
      %453 = vst.msk [vmem:[#allocation2 + $0x1b0] sm:$0xff] %vm398, 0.0
      %454 = vst.msk [vmem:[#allocation2 + $0x1b8] sm:$0xff] %vm398, 0.0
      %455 = vst.msk [vmem:[#allocation2 + $0x1c0] sm:$0xff] %vm398, 0.0
      %456 = vst.msk [vmem:[#allocation2 + $0x1c8] sm:$0xff] %vm398, 0.0
      %457 = vst.msk [vmem:[#allocation2 + $0x1d0] sm:$0xff] %vm398, 0.0
      %458 = vst.msk [vmem:[#allocation2 + $0x1d8] sm:$0xff] %vm398, 0.0
      %459 = vst.msk [vmem:[#allocation2 + $0x1e0] sm:$0xff] %vm398, 0.0
      %460 = vst.msk [vmem:[#allocation2 + $0x1e8] sm:$0xff] %vm398, 0.0
      %461 = vst.msk [vmem:[#allocation2 + $0x1f0] sm:$0xff] %vm398, 0.0
      %462 = vst.msk [vmem:[#allocation2 + $0x1f8] sm:$0xff] %vm398, 0.0
      %463 = vst.msk [vmem:[#allocation2 + $0x200] sm:$0xff] %vm398, 0.0
      %464 = vst.msk [vmem:[#allocation2 + $0x208] sm:$0xff] %vm398, 0.0
      %465 = vst.msk [vmem:[#allocation2 + $0x210] sm:$0xff] %vm398, 0.0
      %466 = vst.msk [vmem:[#allocation2 + $0x218] sm:$0xff] %vm398, 0.0
      %467 = vst.msk [vmem:[#allocation2 + $0x220] sm:$0xff] %vm398, 0.0
      %468 = vst.msk [vmem:[#allocation2 + $0x228] sm:$0xff] %vm398, 0.0
      %469 = vst.msk [vmem:[#allocation2 + $0x230] sm:$0xff] %vm398, 0.0
      %470 = vst.msk [vmem:[#allocation2 + $0x238] sm:$0xff] %vm398, 0.0
      %s471 = scalar_lea.vmem [#allocation2], 32
      %472 = vst.msk [vmem:[%s471 + $0x8] sm:$0xff] %vm398, %v366
      %473 = vst.msk [vmem:[%s471 + $0x10] sm:$0xff] %vm398, %v367
      %474 = vst.msk [vmem:[%s471 + $0x28] sm:$0xff] %vm398, %v368
      %475 = vst.msk [vmem:[%s471 + $0x30] sm:$0xff] %vm398, %v369
      %476 = vst.msk [vmem:[%s471 + $0x48] sm:$0xff] %vm398, %v370
      %477 = vst.msk [vmem:[%s471 + $0x50] sm:$0xff] %vm398, %v371
      %478 = vst.msk [vmem:[%s471 + $0x68] sm:$0xff] %vm398, %v372
      %479 = vst.msk [vmem:[%s471 + $0x70] sm:$0xff] %vm398, %v373
      %480 = vst.msk [vmem:[%s471 + $0x88] sm:$0xff] %vm398, %v374
      %481 = vst.msk [vmem:[%s471 + $0x90] sm:$0xff] %vm398, %v375
      %482 = vst.msk [vmem:[%s471 + $0xa8] sm:$0xff] %vm398, %v376
      %483 = vst.msk [vmem:[%s471 + $0xb0] sm:$0xff] %vm398, %v377
      %484 = vst.msk [vmem:[%s471 + $0xc8] sm:$0xff] %vm398, %v378
      %485 = vst.msk [vmem:[%s471 + $0xd0] sm:$0xff] %vm398, %v379
      %486 = vst.msk [vmem:[%s471 + $0xe8] sm:$0xff] %vm398, %v380
      %487 = vst.msk [vmem:[%s471 + $0xf0] sm:$0xff] %vm398, %v381
      %488 = vst.msk [vmem:[%s471 + $0x108] sm:$0xff] %vm398, %v382
      %489 = vst.msk [vmem:[%s471 + $0x110] sm:$0xff] %vm398, %v383
      %490 = vst.msk [vmem:[%s471 + $0x128] sm:$0xff] %vm398, %v384
      %491 = vst.msk [vmem:[%s471 + $0x130] sm:$0xff] %vm398, %v385
      %492 = vst.msk [vmem:[%s471 + $0x148] sm:$0xff] %vm398, %v386
      %493 = vst.msk [vmem:[%s471 + $0x150] sm:$0xff] %vm398, %v387
      %494 = vst.msk [vmem:[%s471 + $0x168] sm:$0xff] %vm398, %v388
      %495 = vst.msk [vmem:[%s471 + $0x170] sm:$0xff] %vm398, %v389
      %496 = vst.msk [vmem:[%s471 + $0x188] sm:$0xff] %vm398, %v390
      %497 = vst.msk [vmem:[%s471 + $0x190] sm:$0xff] %vm398, %v391
      %498 = vst.msk [vmem:[%s471 + $0x1a8] sm:$0xff] %vm398, %v392
      %499 = vst.msk [vmem:[%s471 + $0x1b0] sm:$0xff] %vm398, %v393
      %500 = vst.msk [vmem:[%s471 + $0x1c8] sm:$0xff] %vm398, %v394
      %501 = vst.msk [vmem:[%s471 + $0x1d0] sm:$0xff] %vm398, %v395
      %502 = vst.msk [vmem:[%s471 + $0x1e8] sm:$0xff] %vm398, %v396
      %503 = vst.msk [vmem:[%s471 + $0x1f0] sm:$0xff] %vm398, %v397
      %p504 = scmp.gt.s32.totalorder %s20, 0
      %v505 = vld [vmem:[%s333] sm:$0xff]
      %v506 = vld [vmem:[%s333 + $0x8] sm:$0xff]
      %s507 = scalar_select %p504, 1, 0
      %v508 = vstv %s507
      %vm509 = vcmp.eq.s32.totalorder %v508, 1
      %v510 = vsel %vm509, %v505, 0.0
      %v511 = vsel %vm509, %v506, 0.0
      %p512 = scmp.lt.s32.totalorder %s20, 0
      %v513 = vld [vmem:[%s350] sm:$0xff]
      %v514 = vld [vmem:[%s350 + $0x8] sm:$0xff]
      %s515 = scalar_select %p512, 1, 0
      %v516 = vstv %s515
      %vm517 = vcmp.eq.s32.totalorder %v516, 1
      %v518 = vsel %vm517, %v513, 0.0
      %v519 = vsel %vm517, %v514, 0.0
      %520 = vst.msk [vmem:[#allocation2 + $0x8] sm:$0xff] %vm398, %v510
      %521 = vst.msk [vmem:[#allocation2 + $0x10] sm:$0xff] %vm398, %v511
      %s522 = scalar_lea.vmem [#allocation2], 544
      %523 = vst.msk [vmem:[%s522 + $0x8] sm:$0xff] %vm398, %v518
      %524 = vst.msk [vmem:[%s522 + $0x10] sm:$0xff] %vm398, %v519
      %v525 = vld [vmem:[%s0] sm:$0xff]
      %v526 = vld [vmem:[%s0 + $0x8] sm:$0xf]
      %v527 = vld [vmem:[#allocation2 + $0x7] sm:$0xff]
      %v528 = vld [vmem:[#allocation2 + $0xf] sm:$0xff]
      %v529 = vld [vmem:[#allocation2 + $0x27] sm:$0xff]
      %v530 = vld [vmem:[#allocation2 + $0x2f] sm:$0xff]
      %v531 = vld [vmem:[#allocation2 + $0x47] sm:$0xff]
      %v532 = vld [vmem:[#allocation2 + $0x4f] sm:$0xff]
      %v533 = vld [vmem:[#allocation2 + $0x67] sm:$0xff]
      %v534 = vld [vmem:[#allocation2 + $0x6f] sm:$0xff]
      %v535 = vld [vmem:[#allocation2 + $0x87] sm:$0xff]
      %v536 = vld [vmem:[#allocation2 + $0x8f] sm:$0xff]
      %v537 = vld [vmem:[#allocation2 + $0xa7] sm:$0xff]
      %v538 = vld [vmem:[#allocation2 + $0xaf] sm:$0xff]
      %v539 = vld [vmem:[#allocation2 + $0xc7] sm:$0xff]
      %v540 = vld [vmem:[#allocation2 + $0xcf] sm:$0xff]
      %v541 = vld [vmem:[#allocation2 + $0xe7] sm:$0xff]
      %v542 = vld [vmem:[#allocation2 + $0xef] sm:$0xff]
      %v543 = vld [vmem:[#allocation2 + $0x107] sm:$0xff]
      %v544 = vld [vmem:[#allocation2 + $0x10f] sm:$0xff]
      %v545 = vld [vmem:[#allocation2 + $0x127] sm:$0xff]
      %v546 = vld [vmem:[#allocation2 + $0x12f] sm:$0xff]
      %v547 = vld [vmem:[#allocation2 + $0x147] sm:$0xff]
      %v548 = vld [vmem:[#allocation2 + $0x14f] sm:$0xff]
      %v549 = vld [vmem:[#allocation2 + $0x167] sm:$0xff]
      %v550 = vld [vmem:[#allocation2 + $0x16f] sm:$0xff]
      %v551 = vld [vmem:[#allocation2 + $0x187] sm:$0xff]
      %v552 = vld [vmem:[#allocation2 + $0x18f] sm:$0xff]
      %v553 = vld [vmem:[#allocation2 + $0x1a7] sm:$0xff]
      %v554 = vld [vmem:[#allocation2 + $0x1af] sm:$0xff]
      %v555 = vld [vmem:[#allocation2 + $0x1c7] sm:$0xff]
      %v556 = vld [vmem:[#allocation2 + $0x1cf] sm:$0xff]
      %v557 = vld [vmem:[#allocation2 + $0x1e7] sm:$0xff]
      %v558 = vld [vmem:[#allocation2 + $0x1ef] sm:$0xff]
      %v559 = vperm.slane %v525, 0
      %v560 = vmul.f32 %v527, %v559
      %v561 = vmul.f32 %v528, %v559
      %v562 = vmul.f32 %v529, %v559
      %v563 = vmul.f32 %v530, %v559
      %v564 = vmul.f32 %v531, %v559
      %v565 = vmul.f32 %v532, %v559
      %v566 = vmul.f32 %v533, %v559
      %v567 = vmul.f32 %v534, %v559
      %v568 = vmul.f32 %v535, %v559
      %v569 = vmul.f32 %v536, %v559
      %v570 = vmul.f32 %v537, %v559
      %v571 = vmul.f32 %v538, %v559
      %v572 = vmul.f32 %v539, %v559
      %v573 = vmul.f32 %v540, %v559
      %v574 = vmul.f32 %v541, %v559
      %v575 = vmul.f32 %v542, %v559
      %v576 = vmul.f32 %v543, %v559
      %v577 = vmul.f32 %v544, %v559
      %v578 = vmul.f32 %v545, %v559
      %v579 = vmul.f32 %v546, %v559
      %v580 = vmul.f32 %v547, %v559
      %v581 = vmul.f32 %v548, %v559
      %v582 = vmul.f32 %v549, %v559
      %v583 = vmul.f32 %v550, %v559
      %v584 = vmul.f32 %v551, %v559
      %v585 = vmul.f32 %v552, %v559
      %v586 = vmul.f32 %v553, %v559
      %v587 = vmul.f32 %v554, %v559
      %v588 = vmul.f32 %v555, %v559
      %v589 = vmul.f32 %v556, %v559
      %v590 = vmul.f32 %v557, %v559
      %v591 = vmul.f32 %v558, %v559
      %v592 = vld [vmem:[#allocation2 + $0x8] sm:$0xff]
      %v593 = vld [vmem:[#allocation2 + $0x10] sm:$0xff]
      %v594 = vld [vmem:[#allocation2 + $0x28] sm:$0xff]
      %v595 = vld [vmem:[#allocation2 + $0x30] sm:$0xff]
      %v596 = vld [vmem:[#allocation2 + $0x48] sm:$0xff]
      %v597 = vld [vmem:[#allocation2 + $0x50] sm:$0xff]
      %v598 = vld [vmem:[#allocation2 + $0x68] sm:$0xff]
      %v599 = vld [vmem:[#allocation2 + $0x70] sm:$0xff]
      %v600 = vld [vmem:[#allocation2 + $0x88] sm:$0xff]
      %v601 = vld [vmem:[#allocation2 + $0x90] sm:$0xff]
      %v602 = vld [vmem:[#allocation2 + $0xa8] sm:$0xff]
      %v603 = vld [vmem:[#allocation2 + $0xb0] sm:$0xff]
      %v604 = vld [vmem:[#allocation2 + $0xc8] sm:$0xff]
      %v605 = vld [vmem:[#allocation2 + $0xd0] sm:$0xff]
      %v606 = vld [vmem:[#allocation2 + $0xe8] sm:$0xff]
      %v607 = vld [vmem:[#allocation2 + $0xf0] sm:$0xff]
      %v608 = vld [vmem:[#allocation2 + $0x108] sm:$0xff]
      %v609 = vld [vmem:[#allocation2 + $0x110] sm:$0xff]
      %v610 = vld [vmem:[#allocation2 + $0x128] sm:$0xff]
      %v611 = vld [vmem:[#allocation2 + $0x130] sm:$0xff]
      %v612 = vld [vmem:[#allocation2 + $0x148] sm:$0xff]
      %v613 = vld [vmem:[#allocation2 + $0x150] sm:$0xff]
      %v614 = vld [vmem:[#allocation2 + $0x168] sm:$0xff]
      %v615 = vld [vmem:[#allocation2 + $0x170] sm:$0xff]
      %v616 = vld [vmem:[#allocation2 + $0x188] sm:$0xff]
      %v617 = vld [vmem:[#allocation2 + $0x190] sm:$0xff]
      %v618 = vld [vmem:[#allocation2 + $0x1a8] sm:$0xff]
      %v619 = vld [vmem:[#allocation2 + $0x1b0] sm:$0xff]
      %v620 = vld [vmem:[#allocation2 + $0x1c8] sm:$0xff]
      %v621 = vld [vmem:[#allocation2 + $0x1d0] sm:$0xff]
      %v622 = vld [vmem:[#allocation2 + $0x1e8] sm:$0xff]
      %v623 = vld [vmem:[#allocation2 + $0x1f0] sm:$0xff]
      %v624 = vperm.slane %v525, 1
      %v625 = vmul.f32 %v592, %v624
      %v626 = vmul.f32 %v593, %v624
      %v627 = vmul.f32 %v594, %v624
      %v628 = vmul.f32 %v595, %v624
      %v629 = vmul.f32 %v596, %v624
      %v630 = vmul.f32 %v597, %v624
      %v631 = vmul.f32 %v598, %v624
      %v632 = vmul.f32 %v599, %v624
      %v633 = vmul.f32 %v600, %v624
      %v634 = vmul.f32 %v601, %v624
      %v635 = vmul.f32 %v602, %v624
      %v636 = vmul.f32 %v603, %v624
      %v637 = vmul.f32 %v604, %v624
      %v638 = vmul.f32 %v605, %v624
      %v639 = vmul.f32 %v606, %v624
      %v640 = vmul.f32 %v607, %v624
      %v641 = vmul.f32 %v608, %v624
      %v642 = vmul.f32 %v609, %v624
      %v643 = vmul.f32 %v610, %v624
      %v644 = vmul.f32 %v611, %v624
      %v645 = vmul.f32 %v612, %v624
      %v646 = vmul.f32 %v613, %v624
      %v647 = vmul.f32 %v614, %v624
      %v648 = vmul.f32 %v615, %v624
      %v649 = vmul.f32 %v616, %v624
      %v650 = vmul.f32 %v617, %v624
      %v651 = vmul.f32 %v618, %v624
      %v652 = vmul.f32 %v619, %v624
      %v653 = vmul.f32 %v620, %v624
      %v654 = vmul.f32 %v621, %v624
      %v655 = vmul.f32 %v622, %v624
      %v656 = vmul.f32 %v623, %v624
      %v657 = vld [vmem:[#allocation2 + $0x9] sm:$0xff]
      %v658 = vld [vmem:[#allocation2 + $0x11] sm:$0xff]
      %v659 = vld [vmem:[#allocation2 + $0x29] sm:$0xff]
      %v660 = vld [vmem:[#allocation2 + $0x31] sm:$0xff]
      %v661 = vld [vmem:[#allocation2 + $0x49] sm:$0xff]
      %v662 = vld [vmem:[#allocation2 + $0x51] sm:$0xff]
      %v663 = vld [vmem:[#allocation2 + $0x69] sm:$0xff]
      %v664 = vld [vmem:[#allocation2 + $0x71] sm:$0xff]
      %v665 = vld [vmem:[#allocation2 + $0x89] sm:$0xff]
      %v666 = vld [vmem:[#allocation2 + $0x91] sm:$0xff]
      %v667 = vld [vmem:[#allocation2 + $0xa9] sm:$0xff]
      %v668 = vld [vmem:[#allocation2 + $0xb1] sm:$0xff]
      %v669 = vld [vmem:[#allocation2 + $0xc9] sm:$0xff]
      %v670 = vld [vmem:[#allocation2 + $0xd1] sm:$0xff]
      %v671 = vld [vmem:[#allocation2 + $0xe9] sm:$0xff]
      %v672 = vld [vmem:[#allocation2 + $0xf1] sm:$0xff]
      %v673 = vld [vmem:[#allocation2 + $0x109] sm:$0xff]
      %v674 = vld [vmem:[#allocation2 + $0x111] sm:$0xff]
      %v675 = vld [vmem:[#allocation2 + $0x129] sm:$0xff]
      %v676 = vld [vmem:[#allocation2 + $0x131] sm:$0xff]
      %v677 = vld [vmem:[#allocation2 + $0x149] sm:$0xff]
      %v678 = vld [vmem:[#allocation2 + $0x151] sm:$0xff]
      %v679 = vld [vmem:[#allocation2 + $0x169] sm:$0xff]
      %v680 = vld [vmem:[#allocation2 + $0x171] sm:$0xff]
      %v681 = vld [vmem:[#allocation2 + $0x189] sm:$0xff]
      %v682 = vld [vmem:[#allocation2 + $0x191] sm:$0xff]
      %v683 = vld [vmem:[#allocation2 + $0x1a9] sm:$0xff]
      %v684 = vld [vmem:[#allocation2 + $0x1b1] sm:$0xff]
      %v685 = vld [vmem:[#allocation2 + $0x1c9] sm:$0xff]
      %v686 = vld [vmem:[#allocation2 + $0x1d1] sm:$0xff]
      %v687 = vld [vmem:[#allocation2 + $0x1e9] sm:$0xff]
      %v688 = vld [vmem:[#allocation2 + $0x1f1] sm:$0xff]
      %v689 = vperm.slane %v525, 2
      %v690 = vmul.f32 %v657, %v689
      %v691 = vmul.f32 %v658, %v689
      %v692 = vmul.f32 %v659, %v689
      %v693 = vmul.f32 %v660, %v689
      %v694 = vmul.f32 %v661, %v689
      %v695 = vmul.f32 %v662, %v689
      %v696 = vmul.f32 %v663, %v689
      %v697 = vmul.f32 %v664, %v689
      %v698 = vmul.f32 %v665, %v689
      %v699 = vmul.f32 %v666, %v689
      %v700 = vmul.f32 %v667, %v689
      %v701 = vmul.f32 %v668, %v689
      %v702 = vmul.f32 %v669, %v689
      %v703 = vmul.f32 %v670, %v689
      %v704 = vmul.f32 %v671, %v689
      %v705 = vmul.f32 %v672, %v689
      %v706 = vmul.f32 %v673, %v689
      %v707 = vmul.f32 %v674, %v689
      %v708 = vmul.f32 %v675, %v689
      %v709 = vmul.f32 %v676, %v689
      %v710 = vmul.f32 %v677, %v689
      %v711 = vmul.f32 %v678, %v689
      %v712 = vmul.f32 %v679, %v689
      %v713 = vmul.f32 %v680, %v689
      %v714 = vmul.f32 %v681, %v689
      %v715 = vmul.f32 %v682, %v689
      %v716 = vmul.f32 %v683, %v689
      %v717 = vmul.f32 %v684, %v689
      %v718 = vmul.f32 %v685, %v689
      %v719 = vmul.f32 %v686, %v689
      %v720 = vmul.f32 %v687, %v689
      %v721 = vmul.f32 %v688, %v689
      %v722 = vld [vmem:[%s471 + $0x7] sm:$0xff]
      %v723 = vld [vmem:[%s471 + $0xf] sm:$0xff]
      %v724 = vld [vmem:[%s471 + $0x27] sm:$0xff]
      %v725 = vld [vmem:[%s471 + $0x2f] sm:$0xff]
      %v726 = vld [vmem:[%s471 + $0x47] sm:$0xff]
      %v727 = vld [vmem:[%s471 + $0x4f] sm:$0xff]
      %v728 = vld [vmem:[%s471 + $0x67] sm:$0xff]
      %v729 = vld [vmem:[%s471 + $0x6f] sm:$0xff]
      %v730 = vld [vmem:[%s471 + $0x87] sm:$0xff]
      %v731 = vld [vmem:[%s471 + $0x8f] sm:$0xff]
      %v732 = vld [vmem:[%s471 + $0xa7] sm:$0xff]
      %v733 = vld [vmem:[%s471 + $0xaf] sm:$0xff]
      %v734 = vld [vmem:[%s471 + $0xc7] sm:$0xff]
      %v735 = vld [vmem:[%s471 + $0xcf] sm:$0xff]
      %v736 = vld [vmem:[%s471 + $0xe7] sm:$0xff]
      %v737 = vld [vmem:[%s471 + $0xef] sm:$0xff]
      %v738 = vld [vmem:[%s471 + $0x107] sm:$0xff]
      %v739 = vld [vmem:[%s471 + $0x10f] sm:$0xff]
      %v740 = vld [vmem:[%s471 + $0x127] sm:$0xff]
      %v741 = vld [vmem:[%s471 + $0x12f] sm:$0xff]
      %v742 = vld [vmem:[%s471 + $0x147] sm:$0xff]
      %v743 = vld [vmem:[%s471 + $0x14f] sm:$0xff]
      %v744 = vld [vmem:[%s471 + $0x167] sm:$0xff]
      %v745 = vld [vmem:[%s471 + $0x16f] sm:$0xff]
      %v746 = vld [vmem:[%s471 + $0x187] sm:$0xff]
      %v747 = vld [vmem:[%s471 + $0x18f] sm:$0xff]
      %v748 = vld [vmem:[%s471 + $0x1a7] sm:$0xff]
      %v749 = vld [vmem:[%s471 + $0x1af] sm:$0xff]
      %v750 = vld [vmem:[%s471 + $0x1c7] sm:$0xff]
      %v751 = vld [vmem:[%s471 + $0x1cf] sm:$0xff]
      %v752 = vld [vmem:[%s471 + $0x1e7] sm:$0xff]
      %v753 = vld [vmem:[%s471 + $0x1ef] sm:$0xff]
      %v754 = vperm.slane %v525, 3
      %v755 = vmul.f32 %v722, %v754
      %v756 = vmul.f32 %v723, %v754
      %v757 = vmul.f32 %v724, %v754
      %v758 = vmul.f32 %v725, %v754
      %v759 = vmul.f32 %v726, %v754
      %v760 = vmul.f32 %v727, %v754
      %v761 = vmul.f32 %v728, %v754
      %v762 = vmul.f32 %v729, %v754
      %v763 = vmul.f32 %v730, %v754
      %v764 = vmul.f32 %v731, %v754
      %v765 = vmul.f32 %v732, %v754
      %v766 = vmul.f32 %v733, %v754
      %v767 = vmul.f32 %v734, %v754
      %v768 = vmul.f32 %v735, %v754
      %v769 = vmul.f32 %v736, %v754
      %v770 = vmul.f32 %v737, %v754
      %v771 = vmul.f32 %v738, %v754
      %v772 = vmul.f32 %v739, %v754
      %v773 = vmul.f32 %v740, %v754
      %v774 = vmul.f32 %v741, %v754
      %v775 = vmul.f32 %v742, %v754
      %v776 = vmul.f32 %v743, %v754
      %v777 = vmul.f32 %v744, %v754
      %v778 = vmul.f32 %v745, %v754
      %v779 = vmul.f32 %v746, %v754
      %v780 = vmul.f32 %v747, %v754
      %v781 = vmul.f32 %v748, %v754
      %v782 = vmul.f32 %v749, %v754
      %v783 = vmul.f32 %v750, %v754
      %v784 = vmul.f32 %v751, %v754
      %v785 = vmul.f32 %v752, %v754
      %v786 = vmul.f32 %v753, %v754
      %v787 = vld [vmem:[%s471 + $0x8] sm:$0xff]
      %v788 = vld [vmem:[%s471 + $0x10] sm:$0xff]
      %v789 = vld [vmem:[%s471 + $0x28] sm:$0xff]
      %v790 = vld [vmem:[%s471 + $0x30] sm:$0xff]
      %v791 = vld [vmem:[%s471 + $0x48] sm:$0xff]
      %v792 = vld [vmem:[%s471 + $0x50] sm:$0xff]
      %v793 = vld [vmem:[%s471 + $0x68] sm:$0xff]
      %v794 = vld [vmem:[%s471 + $0x70] sm:$0xff]
      %v795 = vld [vmem:[%s471 + $0x88] sm:$0xff]
      %v796 = vld [vmem:[%s471 + $0x90] sm:$0xff]
      %v797 = vld [vmem:[%s471 + $0xa8] sm:$0xff]
      %v798 = vld [vmem:[%s471 + $0xb0] sm:$0xff]
      %v799 = vld [vmem:[%s471 + $0xc8] sm:$0xff]
      %v800 = vld [vmem:[%s471 + $0xd0] sm:$0xff]
      %v801 = vld [vmem:[%s471 + $0xe8] sm:$0xff]
      %v802 = vld [vmem:[%s471 + $0xf0] sm:$0xff]
      %v803 = vld [vmem:[%s471 + $0x108] sm:$0xff]
      %v804 = vld [vmem:[%s471 + $0x110] sm:$0xff]
      %v805 = vld [vmem:[%s471 + $0x128] sm:$0xff]
      %v806 = vld [vmem:[%s471 + $0x130] sm:$0xff]
      %v807 = vld [vmem:[%s471 + $0x148] sm:$0xff]
      %v808 = vld [vmem:[%s471 + $0x150] sm:$0xff]
      %v809 = vld [vmem:[%s471 + $0x168] sm:$0xff]
      %v810 = vld [vmem:[%s471 + $0x170] sm:$0xff]
      %v811 = vld [vmem:[%s471 + $0x188] sm:$0xff]
      %v812 = vld [vmem:[%s471 + $0x190] sm:$0xff]
      %v813 = vld [vmem:[%s471 + $0x1a8] sm:$0xff]
      %v814 = vld [vmem:[%s471 + $0x1b0] sm:$0xff]
      %v815 = vld [vmem:[%s471 + $0x1c8] sm:$0xff]
      %v816 = vld [vmem:[%s471 + $0x1d0] sm:$0xff]
      %v817 = vld [vmem:[%s471 + $0x1e8] sm:$0xff]
      %v818 = vld [vmem:[%s471 + $0x1f0] sm:$0xff]
      %v819 = vperm.slane %v525, 4
      %v820 = vmul.f32 %v787, %v819
      %v821 = vmul.f32 %v788, %v819
      %v822 = vmul.f32 %v789, %v819
      %v823 = vmul.f32 %v790, %v819
      %v824 = vmul.f32 %v791, %v819
      %v825 = vmul.f32 %v792, %v819
      %v826 = vmul.f32 %v793, %v819
      %v827 = vmul.f32 %v794, %v819
      %v828 = vmul.f32 %v795, %v819
      %v829 = vmul.f32 %v796, %v819
      %v830 = vmul.f32 %v797, %v819
      %v831 = vmul.f32 %v798, %v819
      %v832 = vmul.f32 %v799, %v819
      %v833 = vmul.f32 %v800, %v819
      %v834 = vmul.f32 %v801, %v819
      %v835 = vmul.f32 %v802, %v819
      %v836 = vmul.f32 %v803, %v819
      %v837 = vmul.f32 %v804, %v819
      %v838 = vmul.f32 %v805, %v819
      %v839 = vmul.f32 %v806, %v819
      %v840 = vmul.f32 %v807, %v819
      %v841 = vmul.f32 %v808, %v819
      %v842 = vmul.f32 %v809, %v819
      %v843 = vmul.f32 %v810, %v819
      %v844 = vmul.f32 %v811, %v819
      %v845 = vmul.f32 %v812, %v819
      %v846 = vmul.f32 %v813, %v819
      %v847 = vmul.f32 %v814, %v819
      %v848 = vmul.f32 %v815, %v819
      %v849 = vmul.f32 %v816, %v819
      %v850 = vmul.f32 %v817, %v819
      %v851 = vmul.f32 %v818, %v819
      %v852 = vld [vmem:[%s471 + $0x9] sm:$0xff]
      %v853 = vld [vmem:[%s471 + $0x11] sm:$0xff]
      %v854 = vld [vmem:[%s471 + $0x29] sm:$0xff]
      %v855 = vld [vmem:[%s471 + $0x31] sm:$0xff]
      %v856 = vld [vmem:[%s471 + $0x49] sm:$0xff]
      %v857 = vld [vmem:[%s471 + $0x51] sm:$0xff]
      %v858 = vld [vmem:[%s471 + $0x69] sm:$0xff]
      %v859 = vld [vmem:[%s471 + $0x71] sm:$0xff]
      %v860 = vld [vmem:[%s471 + $0x89] sm:$0xff]
      %v861 = vld [vmem:[%s471 + $0x91] sm:$0xff]
      %v862 = vld [vmem:[%s471 + $0xa9] sm:$0xff]
      %v863 = vld [vmem:[%s471 + $0xb1] sm:$0xff]
      %v864 = vld [vmem:[%s471 + $0xc9] sm:$0xff]
      %v865 = vld [vmem:[%s471 + $0xd1] sm:$0xff]
      %v866 = vld [vmem:[%s471 + $0xe9] sm:$0xff]
      %v867 = vld [vmem:[%s471 + $0xf1] sm:$0xff]
      %v868 = vld [vmem:[%s471 + $0x109] sm:$0xff]
      %v869 = vld [vmem:[%s471 + $0x111] sm:$0xff]
      %v870 = vld [vmem:[%s471 + $0x129] sm:$0xff]
      %v871 = vld [vmem:[%s471 + $0x131] sm:$0xff]
      %v872 = vld [vmem:[%s471 + $0x149] sm:$0xff]
      %v873 = vld [vmem:[%s471 + $0x151] sm:$0xff]
      %v874 = vld [vmem:[%s471 + $0x169] sm:$0xff]
      %v875 = vld [vmem:[%s471 + $0x171] sm:$0xff]
      %v876 = vld [vmem:[%s471 + $0x189] sm:$0xff]
      %v877 = vld [vmem:[%s471 + $0x191] sm:$0xff]
      %v878 = vld [vmem:[%s471 + $0x1a9] sm:$0xff]
      %v879 = vld [vmem:[%s471 + $0x1b1] sm:$0xff]
      %v880 = vld [vmem:[%s471 + $0x1c9] sm:$0xff]
      %v881 = vld [vmem:[%s471 + $0x1d1] sm:$0xff]
      %v882 = vld [vmem:[%s471 + $0x1e9] sm:$0xff]
      %v883 = vld [vmem:[%s471 + $0x1f1] sm:$0xff]
      %v884 = vperm.slane %v525, 5
      %v885 = vmul.f32 %v852, %v884
      %v886 = vmul.f32 %v853, %v884
      %v887 = vmul.f32 %v854, %v884
      %v888 = vmul.f32 %v855, %v884
      %v889 = vmul.f32 %v856, %v884
      %v890 = vmul.f32 %v857, %v884
      %v891 = vmul.f32 %v858, %v884
      %v892 = vmul.f32 %v859, %v884
      %v893 = vmul.f32 %v860, %v884
      %v894 = vmul.f32 %v861, %v884
      %v895 = vmul.f32 %v862, %v884
      %v896 = vmul.f32 %v863, %v884
      %v897 = vmul.f32 %v864, %v884
      %v898 = vmul.f32 %v865, %v884
      %v899 = vmul.f32 %v866, %v884
      %v900 = vmul.f32 %v867, %v884
      %v901 = vmul.f32 %v868, %v884
      %v902 = vmul.f32 %v869, %v884
      %v903 = vmul.f32 %v870, %v884
      %v904 = vmul.f32 %v871, %v884
      %v905 = vmul.f32 %v872, %v884
      %v906 = vmul.f32 %v873, %v884
      %v907 = vmul.f32 %v874, %v884
      %v908 = vmul.f32 %v875, %v884
      %v909 = vmul.f32 %v876, %v884
      %v910 = vmul.f32 %v877, %v884
      %v911 = vmul.f32 %v878, %v884
      %v912 = vmul.f32 %v879, %v884
      %v913 = vmul.f32 %v880, %v884
      %v914 = vmul.f32 %v881, %v884
      %v915 = vmul.f32 %v882, %v884
      %v916 = vmul.f32 %v883, %v884
      %s917 = scalar_lea.vmem [#allocation2], 64
      %v918 = vld [vmem:[%s917 + $0x7] sm:$0xff]
      %v919 = vld [vmem:[%s917 + $0xf] sm:$0xff]
      %v920 = vld [vmem:[%s917 + $0x27] sm:$0xff]
      %v921 = vld [vmem:[%s917 + $0x2f] sm:$0xff]
      %v922 = vld [vmem:[%s917 + $0x47] sm:$0xff]
      %v923 = vld [vmem:[%s917 + $0x4f] sm:$0xff]
      %v924 = vld [vmem:[%s917 + $0x67] sm:$0xff]
      %v925 = vld [vmem:[%s917 + $0x6f] sm:$0xff]
      %v926 = vld [vmem:[%s917 + $0x87] sm:$0xff]
      %v927 = vld [vmem:[%s917 + $0x8f] sm:$0xff]
      %v928 = vld [vmem:[%s917 + $0xa7] sm:$0xff]
      %v929 = vld [vmem:[%s917 + $0xaf] sm:$0xff]
      %v930 = vld [vmem:[%s917 + $0xc7] sm:$0xff]
      %v931 = vld [vmem:[%s917 + $0xcf] sm:$0xff]
      %v932 = vld [vmem:[%s917 + $0xe7] sm:$0xff]
      %v933 = vld [vmem:[%s917 + $0xef] sm:$0xff]
      %v934 = vld [vmem:[%s917 + $0x107] sm:$0xff]
      %v935 = vld [vmem:[%s917 + $0x10f] sm:$0xff]
      %v936 = vld [vmem:[%s917 + $0x127] sm:$0xff]
      %v937 = vld [vmem:[%s917 + $0x12f] sm:$0xff]
      %v938 = vld [vmem:[%s917 + $0x147] sm:$0xff]
      %v939 = vld [vmem:[%s917 + $0x14f] sm:$0xff]
      %v940 = vld [vmem:[%s917 + $0x167] sm:$0xff]
      %v941 = vld [vmem:[%s917 + $0x16f] sm:$0xff]
      %v942 = vld [vmem:[%s917 + $0x187] sm:$0xff]
      %v943 = vld [vmem:[%s917 + $0x18f] sm:$0xff]
      %v944 = vld [vmem:[%s917 + $0x1a7] sm:$0xff]
      %v945 = vld [vmem:[%s917 + $0x1af] sm:$0xff]
      %v946 = vld [vmem:[%s917 + $0x1c7] sm:$0xff]
      %v947 = vld [vmem:[%s917 + $0x1cf] sm:$0xff]
      %v948 = vld [vmem:[%s917 + $0x1e7] sm:$0xff]
      %v949 = vld [vmem:[%s917 + $0x1ef] sm:$0xff]
      %v950 = vperm.slane %v525, 6
      %v951 = vmul.f32 %v918, %v950
      %v952 = vmul.f32 %v919, %v950
      %v953 = vmul.f32 %v920, %v950
      %v954 = vmul.f32 %v921, %v950
      %v955 = vmul.f32 %v922, %v950
      %v956 = vmul.f32 %v923, %v950
      %v957 = vmul.f32 %v924, %v950
      %v958 = vmul.f32 %v925, %v950
      %v959 = vmul.f32 %v926, %v950
      %v960 = vmul.f32 %v927, %v950
      %v961 = vmul.f32 %v928, %v950
      %v962 = vmul.f32 %v929, %v950
      %v963 = vmul.f32 %v930, %v950
      %v964 = vmul.f32 %v931, %v950
      %v965 = vmul.f32 %v932, %v950
      %v966 = vmul.f32 %v933, %v950
      %v967 = vmul.f32 %v934, %v950
      %v968 = vmul.f32 %v935, %v950
      %v969 = vmul.f32 %v936, %v950
      %v970 = vmul.f32 %v937, %v950
      %v971 = vmul.f32 %v938, %v950
      %v972 = vmul.f32 %v939, %v950
      %v973 = vmul.f32 %v940, %v950
      %v974 = vmul.f32 %v941, %v950
      %v975 = vmul.f32 %v942, %v950
      %v976 = vmul.f32 %v943, %v950
      %v977 = vmul.f32 %v944, %v950
      %v978 = vmul.f32 %v945, %v950
      %v979 = vmul.f32 %v946, %v950
      %v980 = vmul.f32 %v947, %v950
      %v981 = vmul.f32 %v948, %v950
      %v982 = vmul.f32 %v949, %v950
      %v983 = vld [vmem:[%s917 + $0x8] sm:$0xff]
      %v984 = vld [vmem:[%s917 + $0x10] sm:$0xff]
      %v985 = vld [vmem:[%s917 + $0x28] sm:$0xff]
      %v986 = vld [vmem:[%s917 + $0x30] sm:$0xff]
      %v987 = vld [vmem:[%s917 + $0x48] sm:$0xff]
      %v988 = vld [vmem:[%s917 + $0x50] sm:$0xff]
      %v989 = vld [vmem:[%s917 + $0x68] sm:$0xff]
      %v990 = vld [vmem:[%s917 + $0x70] sm:$0xff]
      %v991 = vld [vmem:[%s917 + $0x88] sm:$0xff]
      %v992 = vld [vmem:[%s917 + $0x90] sm:$0xff]
      %v993 = vld [vmem:[%s917 + $0xa8] sm:$0xff]
      %v994 = vld [vmem:[%s917 + $0xb0] sm:$0xff]
      %v995 = vld [vmem:[%s917 + $0xc8] sm:$0xff]
      %v996 = vld [vmem:[%s917 + $0xd0] sm:$0xff]
      %v997 = vld [vmem:[%s917 + $0xe8] sm:$0xff]
      %v998 = vld [vmem:[%s917 + $0xf0] sm:$0xff]
      %v999 = vld [vmem:[%s917 + $0x108] sm:$0xff]
      %v1000 = vld [vmem:[%s917 + $0x110] sm:$0xff]
      %v1001 = vld [vmem:[%s917 + $0x128] sm:$0xff]
      %v1002 = vld [vmem:[%s917 + $0x130] sm:$0xff]
      %v1003 = vld [vmem:[%s917 + $0x148] sm:$0xff]
      %v1004 = vld [vmem:[%s917 + $0x150] sm:$0xff]
      %v1005 = vld [vmem:[%s917 + $0x168] sm:$0xff]
      %v1006 = vld [vmem:[%s917 + $0x170] sm:$0xff]
      %v1007 = vld [vmem:[%s917 + $0x188] sm:$0xff]
      %v1008 = vld [vmem:[%s917 + $0x190] sm:$0xff]
      %v1009 = vld [vmem:[%s917 + $0x1a8] sm:$0xff]
      %v1010 = vld [vmem:[%s917 + $0x1b0] sm:$0xff]
      %v1011 = vld [vmem:[%s917 + $0x1c8] sm:$0xff]
      %v1012 = vld [vmem:[%s917 + $0x1d0] sm:$0xff]
      %v1013 = vld [vmem:[%s917 + $0x1e8] sm:$0xff]
      %v1014 = vld [vmem:[%s917 + $0x1f0] sm:$0xff]
      %v1015 = vperm.slane %v525, 7
      %v1016 = vmul.f32 %v983, %v1015
      %v1017 = vmul.f32 %v984, %v1015
      %v1018 = vmul.f32 %v985, %v1015
      %v1019 = vmul.f32 %v986, %v1015
      %v1020 = vmul.f32 %v987, %v1015
      %v1021 = vmul.f32 %v988, %v1015
      %v1022 = vmul.f32 %v989, %v1015
      %v1023 = vmul.f32 %v990, %v1015
      %v1024 = vmul.f32 %v991, %v1015
      %v1025 = vmul.f32 %v992, %v1015
      %v1026 = vmul.f32 %v993, %v1015
      %v1027 = vmul.f32 %v994, %v1015
      %v1028 = vmul.f32 %v995, %v1015
      %v1029 = vmul.f32 %v996, %v1015
      %v1030 = vmul.f32 %v997, %v1015
      %v1031 = vmul.f32 %v998, %v1015
      %v1032 = vmul.f32 %v999, %v1015
      %v1033 = vmul.f32 %v1000, %v1015
      %v1034 = vmul.f32 %v1001, %v1015
      %v1035 = vmul.f32 %v1002, %v1015
      %v1036 = vmul.f32 %v1003, %v1015
      %v1037 = vmul.f32 %v1004, %v1015
      %v1038 = vmul.f32 %v1005, %v1015
      %v1039 = vmul.f32 %v1006, %v1015
      %v1040 = vmul.f32 %v1007, %v1015
      %v1041 = vmul.f32 %v1008, %v1015
      %v1042 = vmul.f32 %v1009, %v1015
      %v1043 = vmul.f32 %v1010, %v1015
      %v1044 = vmul.f32 %v1011, %v1015
      %v1045 = vmul.f32 %v1012, %v1015
      %v1046 = vmul.f32 %v1013, %v1015
      %v1047 = vmul.f32 %v1014, %v1015
      %v1048 = vld [vmem:[%s917 + $0x9] sm:$0xff]
      %v1049 = vld [vmem:[%s917 + $0x11] sm:$0xff]
      %v1050 = vld [vmem:[%s917 + $0x29] sm:$0xff]
      %v1051 = vld [vmem:[%s917 + $0x31] sm:$0xff]
      %v1052 = vld [vmem:[%s917 + $0x49] sm:$0xff]
      %v1053 = vld [vmem:[%s917 + $0x51] sm:$0xff]
      %v1054 = vld [vmem:[%s917 + $0x69] sm:$0xff]
      %v1055 = vld [vmem:[%s917 + $0x71] sm:$0xff]
      %v1056 = vld [vmem:[%s917 + $0x89] sm:$0xff]
      %v1057 = vld [vmem:[%s917 + $0x91] sm:$0xff]
      %v1058 = vld [vmem:[%s917 + $0xa9] sm:$0xff]
      %v1059 = vld [vmem:[%s917 + $0xb1] sm:$0xff]
      %v1060 = vld [vmem:[%s917 + $0xc9] sm:$0xff]
      %v1061 = vld [vmem:[%s917 + $0xd1] sm:$0xff]
      %v1062 = vld [vmem:[%s917 + $0xe9] sm:$0xff]
      %v1063 = vld [vmem:[%s917 + $0xf1] sm:$0xff]
      %v1064 = vld [vmem:[%s917 + $0x109] sm:$0xff]
      %v1065 = vld [vmem:[%s917 + $0x111] sm:$0xff]
      %v1066 = vld [vmem:[%s917 + $0x129] sm:$0xff]
      %v1067 = vld [vmem:[%s917 + $0x131] sm:$0xff]
      %v1068 = vld [vmem:[%s917 + $0x149] sm:$0xff]
      %v1069 = vld [vmem:[%s917 + $0x151] sm:$0xff]
      %v1070 = vld [vmem:[%s917 + $0x169] sm:$0xff]
      %v1071 = vld [vmem:[%s917 + $0x171] sm:$0xff]
      %v1072 = vld [vmem:[%s917 + $0x189] sm:$0xff]
      %v1073 = vld [vmem:[%s917 + $0x191] sm:$0xff]
      %v1074 = vld [vmem:[%s917 + $0x1a9] sm:$0xff]
      %v1075 = vld [vmem:[%s917 + $0x1b1] sm:$0xff]
      %v1076 = vld [vmem:[%s917 + $0x1c9] sm:$0xff]
      %v1077 = vld [vmem:[%s917 + $0x1d1] sm:$0xff]
      %v1078 = vld [vmem:[%s917 + $0x1e9] sm:$0xff]
      %v1079 = vld [vmem:[%s917 + $0x1f1] sm:$0xff]
      %v1080 = vperm.slane %v526, 0
      %v1081 = vmul.f32 %v1048, %v1080
      %v1082 = vmul.f32 %v1049, %v1080
      %v1083 = vmul.f32 %v1050, %v1080
      %v1084 = vmul.f32 %v1051, %v1080
      %v1085 = vmul.f32 %v1052, %v1080
      %v1086 = vmul.f32 %v1053, %v1080
      %v1087 = vmul.f32 %v1054, %v1080
      %v1088 = vmul.f32 %v1055, %v1080
      %v1089 = vmul.f32 %v1056, %v1080
      %v1090 = vmul.f32 %v1057, %v1080
      %v1091 = vmul.f32 %v1058, %v1080
      %v1092 = vmul.f32 %v1059, %v1080
      %v1093 = vmul.f32 %v1060, %v1080
      %v1094 = vmul.f32 %v1061, %v1080
      %v1095 = vmul.f32 %v1062, %v1080
      %v1096 = vmul.f32 %v1063, %v1080
      %v1097 = vmul.f32 %v1064, %v1080
      %v1098 = vmul.f32 %v1065, %v1080
      %v1099 = vmul.f32 %v1066, %v1080
      %v1100 = vmul.f32 %v1067, %v1080
      %v1101 = vmul.f32 %v1068, %v1080
      %v1102 = vmul.f32 %v1069, %v1080
      %v1103 = vmul.f32 %v1070, %v1080
      %v1104 = vmul.f32 %v1071, %v1080
      %v1105 = vmul.f32 %v1072, %v1080
      %v1106 = vmul.f32 %v1073, %v1080
      %v1107 = vmul.f32 %v1074, %v1080
      %v1108 = vmul.f32 %v1075, %v1080
      %v1109 = vmul.f32 %v1076, %v1080
      %v1110 = vmul.f32 %v1077, %v1080
      %v1111 = vmul.f32 %v1078, %v1080
      %v1112 = vmul.f32 %v1079, %v1080
      %v1113 = vadd.f32 %v560, %v625
      %v1114 = vadd.f32 %v561, %v626
      %v1115 = vadd.f32 %v562, %v627
      %v1116 = vadd.f32 %v563, %v628
      %v1117 = vadd.f32 %v564, %v629
      %v1118 = vadd.f32 %v565, %v630
      %v1119 = vadd.f32 %v566, %v631
      %v1120 = vadd.f32 %v567, %v632
      %v1121 = vadd.f32 %v568, %v633
      %v1122 = vadd.f32 %v569, %v634
      %v1123 = vadd.f32 %v570, %v635
      %v1124 = vadd.f32 %v571, %v636
      %v1125 = vadd.f32 %v572, %v637
      %v1126 = vadd.f32 %v573, %v638
      %v1127 = vadd.f32 %v574, %v639
      %v1128 = vadd.f32 %v575, %v640
      %v1129 = vadd.f32 %v576, %v641
      %v1130 = vadd.f32 %v577, %v642
      %v1131 = vadd.f32 %v578, %v643
      %v1132 = vadd.f32 %v579, %v644
      %v1133 = vadd.f32 %v580, %v645
      %v1134 = vadd.f32 %v581, %v646
      %v1135 = vadd.f32 %v582, %v647
      %v1136 = vadd.f32 %v583, %v648
      %v1137 = vadd.f32 %v584, %v649
      %v1138 = vadd.f32 %v585, %v650
      %v1139 = vadd.f32 %v586, %v651
      %v1140 = vadd.f32 %v587, %v652
      %v1141 = vadd.f32 %v588, %v653
      %v1142 = vadd.f32 %v589, %v654
      %v1143 = vadd.f32 %v590, %v655
      %v1144 = vadd.f32 %v591, %v656
      %v1145 = vadd.f32 %v690, %v755
      %v1146 = vadd.f32 %v691, %v756
      %v1147 = vadd.f32 %v692, %v757
      %v1148 = vadd.f32 %v693, %v758
      %v1149 = vadd.f32 %v694, %v759
      %v1150 = vadd.f32 %v695, %v760
      %v1151 = vadd.f32 %v696, %v761
      %v1152 = vadd.f32 %v697, %v762
      %v1153 = vadd.f32 %v698, %v763
      %v1154 = vadd.f32 %v699, %v764
      %v1155 = vadd.f32 %v700, %v765
      %v1156 = vadd.f32 %v701, %v766
      %v1157 = vadd.f32 %v702, %v767
      %v1158 = vadd.f32 %v703, %v768
      %v1159 = vadd.f32 %v704, %v769
      %v1160 = vadd.f32 %v705, %v770
      %v1161 = vadd.f32 %v706, %v771
      %v1162 = vadd.f32 %v707, %v772
      %v1163 = vadd.f32 %v708, %v773
      %v1164 = vadd.f32 %v709, %v774
      %v1165 = vadd.f32 %v710, %v775
      %v1166 = vadd.f32 %v711, %v776
      %v1167 = vadd.f32 %v712, %v777
      %v1168 = vadd.f32 %v713, %v778
      %v1169 = vadd.f32 %v714, %v779
      %v1170 = vadd.f32 %v715, %v780
      %v1171 = vadd.f32 %v716, %v781
      %v1172 = vadd.f32 %v717, %v782
      %v1173 = vadd.f32 %v718, %v783
      %v1174 = vadd.f32 %v719, %v784
      %v1175 = vadd.f32 %v720, %v785
      %v1176 = vadd.f32 %v721, %v786
      %v1177 = vadd.f32 %v820, %v885
      %v1178 = vadd.f32 %v821, %v886
      %v1179 = vadd.f32 %v822, %v887
      %v1180 = vadd.f32 %v823, %v888
      %v1181 = vadd.f32 %v824, %v889
      %v1182 = vadd.f32 %v825, %v890
      %v1183 = vadd.f32 %v826, %v891
      %v1184 = vadd.f32 %v827, %v892
      %v1185 = vadd.f32 %v828, %v893
      %v1186 = vadd.f32 %v829, %v894
      %v1187 = vadd.f32 %v830, %v895
      %v1188 = vadd.f32 %v831, %v896
      %v1189 = vadd.f32 %v832, %v897
      %v1190 = vadd.f32 %v833, %v898
      %v1191 = vadd.f32 %v834, %v899
      %v1192 = vadd.f32 %v835, %v900
      %v1193 = vadd.f32 %v836, %v901
      %v1194 = vadd.f32 %v837, %v902
      %v1195 = vadd.f32 %v838, %v903
      %v1196 = vadd.f32 %v839, %v904
      %v1197 = vadd.f32 %v840, %v905
      %v1198 = vadd.f32 %v841, %v906
      %v1199 = vadd.f32 %v842, %v907
      %v1200 = vadd.f32 %v843, %v908
      %v1201 = vadd.f32 %v844, %v909
      %v1202 = vadd.f32 %v845, %v910
      %v1203 = vadd.f32 %v846, %v911
      %v1204 = vadd.f32 %v847, %v912
      %v1205 = vadd.f32 %v848, %v913
      %v1206 = vadd.f32 %v849, %v914
      %v1207 = vadd.f32 %v850, %v915
      %v1208 = vadd.f32 %v851, %v916
      %v1209 = vadd.f32 %v951, %v1016
      %v1210 = vadd.f32 %v952, %v1017
      %v1211 = vadd.f32 %v953, %v1018
      %v1212 = vadd.f32 %v954, %v1019
      %v1213 = vadd.f32 %v955, %v1020
      %v1214 = vadd.f32 %v956, %v1021
      %v1215 = vadd.f32 %v957, %v1022
      %v1216 = vadd.f32 %v958, %v1023
      %v1217 = vadd.f32 %v959, %v1024
      %v1218 = vadd.f32 %v960, %v1025
      %v1219 = vadd.f32 %v961, %v1026
      %v1220 = vadd.f32 %v962, %v1027
      %v1221 = vadd.f32 %v963, %v1028
      %v1222 = vadd.f32 %v964, %v1029
      %v1223 = vadd.f32 %v965, %v1030
      %v1224 = vadd.f32 %v966, %v1031
      %v1225 = vadd.f32 %v967, %v1032
      %v1226 = vadd.f32 %v968, %v1033
      %v1227 = vadd.f32 %v969, %v1034
      %v1228 = vadd.f32 %v970, %v1035
      %v1229 = vadd.f32 %v971, %v1036
      %v1230 = vadd.f32 %v972, %v1037
      %v1231 = vadd.f32 %v973, %v1038
      %v1232 = vadd.f32 %v974, %v1039
      %v1233 = vadd.f32 %v975, %v1040
      %v1234 = vadd.f32 %v976, %v1041
      %v1235 = vadd.f32 %v977, %v1042
      %v1236 = vadd.f32 %v978, %v1043
      %v1237 = vadd.f32 %v979, %v1044
      %v1238 = vadd.f32 %v980, %v1045
      %v1239 = vadd.f32 %v981, %v1046
      %v1240 = vadd.f32 %v982, %v1047
      %v1241 = vadd.f32 %v1113, %v1145
      %v1242 = vadd.f32 %v1114, %v1146
      %v1243 = vadd.f32 %v1115, %v1147
      %v1244 = vadd.f32 %v1116, %v1148
      %v1245 = vadd.f32 %v1117, %v1149
      %v1246 = vadd.f32 %v1118, %v1150
      %v1247 = vadd.f32 %v1119, %v1151
      %v1248 = vadd.f32 %v1120, %v1152
      %v1249 = vadd.f32 %v1121, %v1153
      %v1250 = vadd.f32 %v1122, %v1154
      %v1251 = vadd.f32 %v1123, %v1155
      %v1252 = vadd.f32 %v1124, %v1156
      %v1253 = vadd.f32 %v1125, %v1157
      %v1254 = vadd.f32 %v1126, %v1158
      %v1255 = vadd.f32 %v1127, %v1159
      %v1256 = vadd.f32 %v1128, %v1160
      %v1257 = vadd.f32 %v1129, %v1161
      %v1258 = vadd.f32 %v1130, %v1162
      %v1259 = vadd.f32 %v1131, %v1163
      %v1260 = vadd.f32 %v1132, %v1164
      %v1261 = vadd.f32 %v1133, %v1165
      %v1262 = vadd.f32 %v1134, %v1166
      %v1263 = vadd.f32 %v1135, %v1167
      %v1264 = vadd.f32 %v1136, %v1168
      %v1265 = vadd.f32 %v1137, %v1169
      %v1266 = vadd.f32 %v1138, %v1170
      %v1267 = vadd.f32 %v1139, %v1171
      %v1268 = vadd.f32 %v1140, %v1172
      %v1269 = vadd.f32 %v1141, %v1173
      %v1270 = vadd.f32 %v1142, %v1174
      %v1271 = vadd.f32 %v1143, %v1175
      %v1272 = vadd.f32 %v1144, %v1176
      %v1273 = vadd.f32 %v1177, %v1209
      %v1274 = vadd.f32 %v1178, %v1210
      %v1275 = vadd.f32 %v1179, %v1211
      %v1276 = vadd.f32 %v1180, %v1212
      %v1277 = vadd.f32 %v1181, %v1213
      %v1278 = vadd.f32 %v1182, %v1214
      %v1279 = vadd.f32 %v1183, %v1215
      %v1280 = vadd.f32 %v1184, %v1216
      %v1281 = vadd.f32 %v1185, %v1217
      %v1282 = vadd.f32 %v1186, %v1218
      %v1283 = vadd.f32 %v1187, %v1219
      %v1284 = vadd.f32 %v1188, %v1220
      %v1285 = vadd.f32 %v1189, %v1221
      %v1286 = vadd.f32 %v1190, %v1222
      %v1287 = vadd.f32 %v1191, %v1223
      %v1288 = vadd.f32 %v1192, %v1224
      %v1289 = vadd.f32 %v1193, %v1225
      %v1290 = vadd.f32 %v1194, %v1226
      %v1291 = vadd.f32 %v1195, %v1227
      %v1292 = vadd.f32 %v1196, %v1228
      %v1293 = vadd.f32 %v1197, %v1229
      %v1294 = vadd.f32 %v1198, %v1230
      %v1295 = vadd.f32 %v1199, %v1231
      %v1296 = vadd.f32 %v1200, %v1232
      %v1297 = vadd.f32 %v1201, %v1233
      %v1298 = vadd.f32 %v1202, %v1234
      %v1299 = vadd.f32 %v1203, %v1235
      %v1300 = vadd.f32 %v1204, %v1236
      %v1301 = vadd.f32 %v1205, %v1237
      %v1302 = vadd.f32 %v1206, %v1238
      %v1303 = vadd.f32 %v1207, %v1239
      %v1304 = vadd.f32 %v1208, %v1240
      %v1305 = vadd.f32 %v1241, %v1273
      %v1306 = vadd.f32 %v1242, %v1274
      %v1307 = vadd.f32 %v1243, %v1275
      %v1308 = vadd.f32 %v1244, %v1276
      %v1309 = vadd.f32 %v1245, %v1277
      %v1310 = vadd.f32 %v1246, %v1278
      %v1311 = vadd.f32 %v1247, %v1279
      %v1312 = vadd.f32 %v1248, %v1280
      %v1313 = vadd.f32 %v1249, %v1281
      %v1314 = vadd.f32 %v1250, %v1282
      %v1315 = vadd.f32 %v1251, %v1283
      %v1316 = vadd.f32 %v1252, %v1284
      %v1317 = vadd.f32 %v1253, %v1285
      %v1318 = vadd.f32 %v1254, %v1286
      %v1319 = vadd.f32 %v1255, %v1287
      %v1320 = vadd.f32 %v1256, %v1288
      %v1321 = vadd.f32 %v1257, %v1289
      %v1322 = vadd.f32 %v1258, %v1290
      %v1323 = vadd.f32 %v1259, %v1291
      %v1324 = vadd.f32 %v1260, %v1292
      %v1325 = vadd.f32 %v1261, %v1293
      %v1326 = vadd.f32 %v1262, %v1294
      %v1327 = vadd.f32 %v1263, %v1295
      %v1328 = vadd.f32 %v1264, %v1296
      %v1329 = vadd.f32 %v1265, %v1297
      %v1330 = vadd.f32 %v1266, %v1298
      %v1331 = vadd.f32 %v1267, %v1299
      %v1332 = vadd.f32 %v1268, %v1300
      %v1333 = vadd.f32 %v1269, %v1301
      %v1334 = vadd.f32 %v1270, %v1302
      %v1335 = vadd.f32 %v1271, %v1303
      %v1336 = vadd.f32 %v1272, %v1304
      %v1337 = vadd.f32 %v1305, %v1081
      %v1338 = vadd.f32 %v1306, %v1082
      %v1339 = vadd.f32 %v1307, %v1083
      %v1340 = vadd.f32 %v1308, %v1084
      %v1341 = vadd.f32 %v1309, %v1085
      %v1342 = vadd.f32 %v1310, %v1086
      %v1343 = vadd.f32 %v1311, %v1087
      %v1344 = vadd.f32 %v1312, %v1088
      %v1345 = vadd.f32 %v1313, %v1089
      %v1346 = vadd.f32 %v1314, %v1090
      %v1347 = vadd.f32 %v1315, %v1091
      %v1348 = vadd.f32 %v1316, %v1092
      %v1349 = vadd.f32 %v1317, %v1093
      %v1350 = vadd.f32 %v1318, %v1094
      %v1351 = vadd.f32 %v1319, %v1095
      %v1352 = vadd.f32 %v1320, %v1096
      %v1353 = vadd.f32 %v1321, %v1097
      %v1354 = vadd.f32 %v1322, %v1098
      %v1355 = vadd.f32 %v1323, %v1099
      %v1356 = vadd.f32 %v1324, %v1100
      %v1357 = vadd.f32 %v1325, %v1101
      %v1358 = vadd.f32 %v1326, %v1102
      %v1359 = vadd.f32 %v1327, %v1103
      %v1360 = vadd.f32 %v1328, %v1104
      %v1361 = vadd.f32 %v1329, %v1105
      %v1362 = vadd.f32 %v1330, %v1106
      %v1363 = vadd.f32 %v1331, %v1107
      %v1364 = vadd.f32 %v1332, %v1108
      %v1365 = vadd.f32 %v1333, %v1109
      %v1366 = vadd.f32 %v1334, %v1110
      %v1367 = vadd.f32 %v1335, %v1111
      %v1368 = vadd.f32 %v1336, %v1112
      %v1369 = vperm.slane %v526, 1
      %v1370 = vadd.f32 %v1337, %v1369
      %v1371 = vadd.f32 %v1338, %v1369
      %v1372 = vadd.f32 %v1339, %v1369
      %v1373 = vadd.f32 %v1340, %v1369
      %v1374 = vadd.f32 %v1341, %v1369
      %v1375 = vadd.f32 %v1342, %v1369
      %v1376 = vadd.f32 %v1343, %v1369
      %v1377 = vadd.f32 %v1344, %v1369
      %v1378 = vadd.f32 %v1345, %v1369
      %v1379 = vadd.f32 %v1346, %v1369
      %v1380 = vadd.f32 %v1347, %v1369
      %v1381 = vadd.f32 %v1348, %v1369
      %v1382 = vadd.f32 %v1349, %v1369
      %v1383 = vadd.f32 %v1350, %v1369
      %v1384 = vadd.f32 %v1351, %v1369
      %v1385 = vadd.f32 %v1352, %v1369
      %v1386 = vadd.f32 %v1353, %v1369
      %v1387 = vadd.f32 %v1354, %v1369
      %v1388 = vadd.f32 %v1355, %v1369
      %v1389 = vadd.f32 %v1356, %v1369
      %v1390 = vadd.f32 %v1357, %v1369
      %v1391 = vadd.f32 %v1358, %v1369
      %v1392 = vadd.f32 %v1359, %v1369
      %v1393 = vadd.f32 %v1360, %v1369
      %v1394 = vadd.f32 %v1361, %v1369
      %v1395 = vadd.f32 %v1362, %v1369
      %v1396 = vadd.f32 %v1363, %v1369
      %v1397 = vadd.f32 %v1364, %v1369
      %v1398 = vadd.f32 %v1365, %v1369
      %v1399 = vadd.f32 %v1366, %v1369
      %v1400 = vadd.f32 %v1367, %v1369
      %v1401 = vadd.f32 %v1368, %v1369
      %v1402 = vmul.f32 %v1370, %v1370
      %v1403 = vmul.f32 %v1371, %v1371
      %v1404 = vmul.f32 %v1372, %v1372
      %v1405 = vmul.f32 %v1373, %v1373
      %v1406 = vmul.f32 %v1374, %v1374
      %v1407 = vmul.f32 %v1375, %v1375
      %v1408 = vmul.f32 %v1376, %v1376
      %v1409 = vmul.f32 %v1377, %v1377
      %v1410 = vmul.f32 %v1378, %v1378
      %v1411 = vmul.f32 %v1379, %v1379
      %v1412 = vmul.f32 %v1380, %v1380
      %v1413 = vmul.f32 %v1381, %v1381
      %v1414 = vmul.f32 %v1382, %v1382
      %v1415 = vmul.f32 %v1383, %v1383
      %v1416 = vmul.f32 %v1384, %v1384
      %v1417 = vmul.f32 %v1385, %v1385
      %v1418 = vmul.f32 %v1386, %v1386
      %v1419 = vmul.f32 %v1387, %v1387
      %v1420 = vmul.f32 %v1388, %v1388
      %v1421 = vmul.f32 %v1389, %v1389
      %v1422 = vmul.f32 %v1390, %v1390
      %v1423 = vmul.f32 %v1391, %v1391
      %v1424 = vmul.f32 %v1392, %v1392
      %v1425 = vmul.f32 %v1393, %v1393
      %v1426 = vmul.f32 %v1394, %v1394
      %v1427 = vmul.f32 %v1395, %v1395
      %v1428 = vmul.f32 %v1396, %v1396
      %v1429 = vmul.f32 %v1397, %v1397
      %v1430 = vmul.f32 %v1398, %v1398
      %v1431 = vmul.f32 %v1399, %v1399
      %v1432 = vmul.f32 %v1400, %v1400
      %v1433 = vmul.f32 %v1401, %v1401
      %v1434 = vmul.f32 %v1370, %v1402
      %v1435 = vmul.f32 %v1371, %v1403
      %v1436 = vmul.f32 %v1372, %v1404
      %v1437 = vmul.f32 %v1373, %v1405
      %v1438 = vmul.f32 %v1374, %v1406
      %v1439 = vmul.f32 %v1375, %v1407
      %v1440 = vmul.f32 %v1376, %v1408
      %v1441 = vmul.f32 %v1377, %v1409
      %v1442 = vmul.f32 %v1378, %v1410
      %v1443 = vmul.f32 %v1379, %v1411
      %v1444 = vmul.f32 %v1380, %v1412
      %v1445 = vmul.f32 %v1381, %v1413
      %v1446 = vmul.f32 %v1382, %v1414
      %v1447 = vmul.f32 %v1383, %v1415
      %v1448 = vmul.f32 %v1384, %v1416
      %v1449 = vmul.f32 %v1385, %v1417
      %v1450 = vmul.f32 %v1386, %v1418
      %v1451 = vmul.f32 %v1387, %v1419
      %v1452 = vmul.f32 %v1388, %v1420
      %v1453 = vmul.f32 %v1389, %v1421
      %v1454 = vmul.f32 %v1390, %v1422
      %v1455 = vmul.f32 %v1391, %v1423
      %v1456 = vmul.f32 %v1392, %v1424
      %v1457 = vmul.f32 %v1393, %v1425
      %v1458 = vmul.f32 %v1394, %v1426
      %v1459 = vmul.f32 %v1395, %v1427
      %v1460 = vmul.f32 %v1396, %v1428
      %v1461 = vmul.f32 %v1397, %v1429
      %v1462 = vmul.f32 %v1398, %v1430
      %v1463 = vmul.f32 %v1399, %v1431
      %v1464 = vmul.f32 %v1400, %v1432
      %v1465 = vmul.f32 %v1401, %v1433
      %v1466 = vmul.f32 %v1434, 0.044715
      %v1467 = vmul.f32 %v1435, 0.044715
      %v1468 = vmul.f32 %v1436, 0.044715
      %v1469 = vmul.f32 %v1437, 0.044715
      %v1470 = vmul.f32 %v1438, 0.044715
      %v1471 = vmul.f32 %v1439, 0.044715
      %v1472 = vmul.f32 %v1440, 0.044715
      %v1473 = vmul.f32 %v1441, 0.044715
      %v1474 = vmul.f32 %v1442, 0.044715
      %v1475 = vmul.f32 %v1443, 0.044715
      %v1476 = vmul.f32 %v1444, 0.044715
      %v1477 = vmul.f32 %v1445, 0.044715
      %v1478 = vmul.f32 %v1446, 0.044715
      %v1479 = vmul.f32 %v1447, 0.044715
      %v1480 = vmul.f32 %v1448, 0.044715
      %v1481 = vmul.f32 %v1449, 0.044715
      %v1482 = vmul.f32 %v1450, 0.044715
      %v1483 = vmul.f32 %v1451, 0.044715
      %v1484 = vmul.f32 %v1452, 0.044715
      %v1485 = vmul.f32 %v1453, 0.044715
      %v1486 = vmul.f32 %v1454, 0.044715
      %v1487 = vmul.f32 %v1455, 0.044715
      %v1488 = vmul.f32 %v1456, 0.044715
      %v1489 = vmul.f32 %v1457, 0.044715
      %v1490 = vmul.f32 %v1458, 0.044715
      %v1491 = vmul.f32 %v1459, 0.044715
      %v1492 = vmul.f32 %v1460, 0.044715
      %v1493 = vmul.f32 %v1461, 0.044715
      %v1494 = vmul.f32 %v1462, 0.044715
      %v1495 = vmul.f32 %v1463, 0.044715
      %v1496 = vmul.f32 %v1464, 0.044715
      %v1497 = vmul.f32 %v1465, 0.044715
      %v1498 = vadd.f32 %v1370, %v1466
      %v1499 = vadd.f32 %v1371, %v1467
      %v1500 = vadd.f32 %v1372, %v1468
      %v1501 = vadd.f32 %v1373, %v1469
      %v1502 = vadd.f32 %v1374, %v1470
      %v1503 = vadd.f32 %v1375, %v1471
      %v1504 = vadd.f32 %v1376, %v1472
      %v1505 = vadd.f32 %v1377, %v1473
      %v1506 = vadd.f32 %v1378, %v1474
      %v1507 = vadd.f32 %v1379, %v1475
      %v1508 = vadd.f32 %v1380, %v1476
      %v1509 = vadd.f32 %v1381, %v1477
      %v1510 = vadd.f32 %v1382, %v1478
      %v1511 = vadd.f32 %v1383, %v1479
      %v1512 = vadd.f32 %v1384, %v1480
      %v1513 = vadd.f32 %v1385, %v1481
      %v1514 = vadd.f32 %v1386, %v1482
      %v1515 = vadd.f32 %v1387, %v1483
      %v1516 = vadd.f32 %v1388, %v1484
      %v1517 = vadd.f32 %v1389, %v1485
      %v1518 = vadd.f32 %v1390, %v1486
      %v1519 = vadd.f32 %v1391, %v1487
      %v1520 = vadd.f32 %v1392, %v1488
      %v1521 = vadd.f32 %v1393, %v1489
      %v1522 = vadd.f32 %v1394, %v1490
      %v1523 = vadd.f32 %v1395, %v1491
      %v1524 = vadd.f32 %v1396, %v1492
      %v1525 = vadd.f32 %v1397, %v1493
      %v1526 = vadd.f32 %v1398, %v1494
      %v1527 = vadd.f32 %v1399, %v1495
      %v1528 = vadd.f32 %v1400, %v1496
      %v1529 = vadd.f32 %v1401, %v1497
      %v1530 = vmul.f32 %v1498, 0.7978846
      %v1531 = vmul.f32 %v1499, 0.7978846
      %v1532 = vmul.f32 %v1500, 0.7978846
      %v1533 = vmul.f32 %v1501, 0.7978846
      %v1534 = vmul.f32 %v1502, 0.7978846
      %v1535 = vmul.f32 %v1503, 0.7978846
      %v1536 = vmul.f32 %v1504, 0.7978846
      %v1537 = vmul.f32 %v1505, 0.7978846
      %v1538 = vmul.f32 %v1506, 0.7978846
      %v1539 = vmul.f32 %v1507, 0.7978846
      %v1540 = vmul.f32 %v1508, 0.7978846
      %v1541 = vmul.f32 %v1509, 0.7978846
      %v1542 = vmul.f32 %v1510, 0.7978846
      %v1543 = vmul.f32 %v1511, 0.7978846
      %v1544 = vmul.f32 %v1512, 0.7978846
      %v1545 = vmul.f32 %v1513, 0.7978846
      %v1546 = vmul.f32 %v1514, 0.7978846
      %v1547 = vmul.f32 %v1515, 0.7978846
      %v1548 = vmul.f32 %v1516, 0.7978846
      %v1549 = vmul.f32 %v1517, 0.7978846
      %v1550 = vmul.f32 %v1518, 0.7978846
      %v1551 = vmul.f32 %v1519, 0.7978846
      %v1552 = vmul.f32 %v1520, 0.7978846
      %v1553 = vmul.f32 %v1521, 0.7978846
      %v1554 = vmul.f32 %v1522, 0.7978846
      %v1555 = vmul.f32 %v1523, 0.7978846
      %v1556 = vmul.f32 %v1524, 0.7978846
      %v1557 = vmul.f32 %v1525, 0.7978846
      %v1558 = vmul.f32 %v1526, 0.7978846
      %v1559 = vmul.f32 %v1527, 0.7978846
      %v1560 = vmul.f32 %v1528, 0.7978846
      %v1561 = vmul.f32 %v1529, 0.7978846
      %v1562 = vtanh.pop %v1530
      %v1563 = vtanh.pop %v1531
      %v1564 = vtanh.pop %v1532
      %v1565 = vtanh.pop %v1533
      %v1566 = vtanh.pop %v1534
      %v1567 = vtanh.pop %v1535
      %v1568 = vtanh.pop %v1536
      %v1569 = vtanh.pop %v1537
      %v1570 = vtanh.pop %v1538
      %v1571 = vtanh.pop %v1539
      %v1572 = vtanh.pop %v1540
      %v1573 = vtanh.pop %v1541
      %v1574 = vtanh.pop %v1542
      %v1575 = vtanh.pop %v1543
      %v1576 = vtanh.pop %v1544
      %v1577 = vtanh.pop %v1545
      %v1578 = vtanh.pop %v1546
      %v1579 = vtanh.pop %v1547
      %v1580 = vtanh.pop %v1548
      %v1581 = vtanh.pop %v1549
      %v1582 = vtanh.pop %v1550
      %v1583 = vtanh.pop %v1551
      %v1584 = vtanh.pop %v1552
      %v1585 = vtanh.pop %v1553
      %v1586 = vtanh.pop %v1554
      %v1587 = vtanh.pop %v1555
      %v1588 = vtanh.pop %v1556
      %v1589 = vtanh.pop %v1557
      %v1590 = vtanh.pop %v1558
      %v1591 = vtanh.pop %v1559
      %v1592 = vtanh.pop %v1560
      %v1593 = vtanh.pop %v1561
      %v1594 = vadd.f32 %v1562, 1.0
      %v1595 = vadd.f32 %v1563, 1.0
      %v1596 = vadd.f32 %v1564, 1.0
      %v1597 = vadd.f32 %v1565, 1.0
      %v1598 = vadd.f32 %v1566, 1.0
      %v1599 = vadd.f32 %v1567, 1.0
      %v1600 = vadd.f32 %v1568, 1.0
      %v1601 = vadd.f32 %v1569, 1.0
      %v1602 = vadd.f32 %v1570, 1.0
      %v1603 = vadd.f32 %v1571, 1.0
      %v1604 = vadd.f32 %v1572, 1.0
      %v1605 = vadd.f32 %v1573, 1.0
      %v1606 = vadd.f32 %v1574, 1.0
      %v1607 = vadd.f32 %v1575, 1.0
      %v1608 = vadd.f32 %v1576, 1.0
      %v1609 = vadd.f32 %v1577, 1.0
      %v1610 = vadd.f32 %v1578, 1.0
      %v1611 = vadd.f32 %v1579, 1.0
      %v1612 = vadd.f32 %v1580, 1.0
      %v1613 = vadd.f32 %v1581, 1.0
      %v1614 = vadd.f32 %v1582, 1.0
      %v1615 = vadd.f32 %v1583, 1.0
      %v1616 = vadd.f32 %v1584, 1.0
      %v1617 = vadd.f32 %v1585, 1.0
      %v1618 = vadd.f32 %v1586, 1.0
      %v1619 = vadd.f32 %v1587, 1.0
      %v1620 = vadd.f32 %v1588, 1.0
      %v1621 = vadd.f32 %v1589, 1.0
      %v1622 = vadd.f32 %v1590, 1.0
      %v1623 = vadd.f32 %v1591, 1.0
      %v1624 = vadd.f32 %v1592, 1.0
      %v1625 = vadd.f32 %v1593, 1.0
      %v1626 = vmul.f32 %v1594, 0.5
      %v1627 = vmul.f32 %v1595, 0.5
      %v1628 = vmul.f32 %v1596, 0.5
      %v1629 = vmul.f32 %v1597, 0.5
      %v1630 = vmul.f32 %v1598, 0.5
      %v1631 = vmul.f32 %v1599, 0.5
      %v1632 = vmul.f32 %v1600, 0.5
      %v1633 = vmul.f32 %v1601, 0.5
      %v1634 = vmul.f32 %v1602, 0.5
      %v1635 = vmul.f32 %v1603, 0.5
      %v1636 = vmul.f32 %v1604, 0.5
      %v1637 = vmul.f32 %v1605, 0.5
      %v1638 = vmul.f32 %v1606, 0.5
      %v1639 = vmul.f32 %v1607, 0.5
      %v1640 = vmul.f32 %v1608, 0.5
      %v1641 = vmul.f32 %v1609, 0.5
      %v1642 = vmul.f32 %v1610, 0.5
      %v1643 = vmul.f32 %v1611, 0.5
      %v1644 = vmul.f32 %v1612, 0.5
      %v1645 = vmul.f32 %v1613, 0.5
      %v1646 = vmul.f32 %v1614, 0.5
      %v1647 = vmul.f32 %v1615, 0.5
      %v1648 = vmul.f32 %v1616, 0.5
      %v1649 = vmul.f32 %v1617, 0.5
      %v1650 = vmul.f32 %v1618, 0.5
      %v1651 = vmul.f32 %v1619, 0.5
      %v1652 = vmul.f32 %v1620, 0.5
      %v1653 = vmul.f32 %v1621, 0.5
      %v1654 = vmul.f32 %v1622, 0.5
      %v1655 = vmul.f32 %v1623, 0.5
      %v1656 = vmul.f32 %v1624, 0.5
      %v1657 = vmul.f32 %v1625, 0.5
      %v1658 = vmul.f32 %v1370, %v1626
      %v1659 = vmul.f32 %v1371, %v1627
      %v1660 = vmul.f32 %v1372, %v1628
      %v1661 = vmul.f32 %v1373, %v1629
      %v1662 = vmul.f32 %v1374, %v1630
      %v1663 = vmul.f32 %v1375, %v1631
      %v1664 = vmul.f32 %v1376, %v1632
      %v1665 = vmul.f32 %v1377, %v1633
      %v1666 = vmul.f32 %v1378, %v1634
      %v1667 = vmul.f32 %v1379, %v1635
      %v1668 = vmul.f32 %v1380, %v1636
      %v1669 = vmul.f32 %v1381, %v1637
      %v1670 = vmul.f32 %v1382, %v1638
      %v1671 = vmul.f32 %v1383, %v1639
      %v1672 = vmul.f32 %v1384, %v1640
      %v1673 = vmul.f32 %v1385, %v1641
      %v1674 = vmul.f32 %v1386, %v1642
      %v1675 = vmul.f32 %v1387, %v1643
      %v1676 = vmul.f32 %v1388, %v1644
      %v1677 = vmul.f32 %v1389, %v1645
      %v1678 = vmul.f32 %v1390, %v1646
      %v1679 = vmul.f32 %v1391, %v1647
      %v1680 = vmul.f32 %v1392, %v1648
      %v1681 = vmul.f32 %v1393, %v1649
      %v1682 = vmul.f32 %v1394, %v1650
      %v1683 = vmul.f32 %v1395, %v1651
      %v1684 = vmul.f32 %v1396, %v1652
      %v1685 = vmul.f32 %v1397, %v1653
      %v1686 = vmul.f32 %v1398, %v1654
      %v1687 = vmul.f32 %v1399, %v1655
      %v1688 = vmul.f32 %v1400, %v1656
      %v1689 = vmul.f32 %v1401, %v1657
      %v1690 = vperm.slane %v526, 2
      %v1691 = vmul.f32 %v1658, %v1690
      %v1692 = vmul.f32 %v1659, %v1690
      %v1693 = vmul.f32 %v1660, %v1690
      %v1694 = vmul.f32 %v1661, %v1690
      %v1695 = vmul.f32 %v1662, %v1690
      %v1696 = vmul.f32 %v1663, %v1690
      %v1697 = vmul.f32 %v1664, %v1690
      %v1698 = vmul.f32 %v1665, %v1690
      %v1699 = vmul.f32 %v1666, %v1690
      %v1700 = vmul.f32 %v1667, %v1690
      %v1701 = vmul.f32 %v1668, %v1690
      %v1702 = vmul.f32 %v1669, %v1690
      %v1703 = vmul.f32 %v1670, %v1690
      %v1704 = vmul.f32 %v1671, %v1690
      %v1705 = vmul.f32 %v1672, %v1690
      %v1706 = vmul.f32 %v1673, %v1690
      %v1707 = vmul.f32 %v1674, %v1690
      %v1708 = vmul.f32 %v1675, %v1690
      %v1709 = vmul.f32 %v1676, %v1690
      %v1710 = vmul.f32 %v1677, %v1690
      %v1711 = vmul.f32 %v1678, %v1690
      %v1712 = vmul.f32 %v1679, %v1690
      %v1713 = vmul.f32 %v1680, %v1690
      %v1714 = vmul.f32 %v1681, %v1690
      %v1715 = vmul.f32 %v1682, %v1690
      %v1716 = vmul.f32 %v1683, %v1690
      %v1717 = vmul.f32 %v1684, %v1690
      %v1718 = vmul.f32 %v1685, %v1690
      %v1719 = vmul.f32 %v1686, %v1690
      %v1720 = vmul.f32 %v1687, %v1690
      %v1721 = vmul.f32 %v1688, %v1690
      %v1722 = vmul.f32 %v1689, %v1690
      %v1723 = vperm.slane %v526, 3
      %v1724 = vadd.f32 %v1691, %v1723
      %v1725 = vadd.f32 %v1692, %v1723
      %v1726 = vadd.f32 %v1693, %v1723
      %v1727 = vadd.f32 %v1694, %v1723
      %v1728 = vadd.f32 %v1695, %v1723
      %v1729 = vadd.f32 %v1696, %v1723
      %v1730 = vadd.f32 %v1697, %v1723
      %v1731 = vadd.f32 %v1698, %v1723
      %v1732 = vadd.f32 %v1699, %v1723
      %v1733 = vadd.f32 %v1700, %v1723
      %v1734 = vadd.f32 %v1701, %v1723
      %v1735 = vadd.f32 %v1702, %v1723
      %v1736 = vadd.f32 %v1703, %v1723
      %v1737 = vadd.f32 %v1704, %v1723
      %v1738 = vadd.f32 %v1705, %v1723
      %v1739 = vadd.f32 %v1706, %v1723
      %v1740 = vadd.f32 %v1707, %v1723
      %v1741 = vadd.f32 %v1708, %v1723
      %v1742 = vadd.f32 %v1709, %v1723
      %v1743 = vadd.f32 %v1710, %v1723
      %v1744 = vadd.f32 %v1711, %v1723
      %v1745 = vadd.f32 %v1712, %v1723
      %v1746 = vadd.f32 %v1713, %v1723
      %v1747 = vadd.f32 %v1714, %v1723
      %v1748 = vadd.f32 %v1715, %v1723
      %v1749 = vadd.f32 %v1716, %v1723
      %v1750 = vadd.f32 %v1717, %v1723
      %v1751 = vadd.f32 %v1718, %v1723
      %v1752 = vadd.f32 %v1719, %v1723
      %v1753 = vadd.f32 %v1720, %v1723
      %v1754 = vadd.f32 %v1721, %v1723
      %v1755 = vadd.f32 %v1722, %v1723
      %v1756 = vadd.f32 %v1724, %v366
      %v1757 = vadd.f32 %v1725, %v367
      %v1758 = vadd.f32 %v1726, %v368
      %v1759 = vadd.f32 %v1727, %v369
      %v1760 = vadd.f32 %v1728, %v370
      %v1761 = vadd.f32 %v1729, %v371
      %v1762 = vadd.f32 %v1730, %v372
      %v1763 = vadd.f32 %v1731, %v373
      %v1764 = vadd.f32 %v1732, %v374
      %v1765 = vadd.f32 %v1733, %v375
      %v1766 = vadd.f32 %v1734, %v376
      %v1767 = vadd.f32 %v1735, %v377
      %v1768 = vadd.f32 %v1736, %v378
      %v1769 = vadd.f32 %v1737, %v379
      %v1770 = vadd.f32 %v1738, %v380
      %v1771 = vadd.f32 %v1739, %v381
      %v1772 = vadd.f32 %v1740, %v382
      %v1773 = vadd.f32 %v1741, %v383
      %v1774 = vadd.f32 %v1742, %v384
      %v1775 = vadd.f32 %v1743, %v385
      %v1776 = vadd.f32 %v1744, %v386
      %v1777 = vadd.f32 %v1745, %v387
      %v1778 = vadd.f32 %v1746, %v388
      %v1779 = vadd.f32 %v1747, %v389
      %v1780 = vadd.f32 %v1748, %v390
      %v1781 = vadd.f32 %v1749, %v391
      %v1782 = vadd.f32 %v1750, %v392
      %v1783 = vadd.f32 %v1751, %v393
      %v1784 = vadd.f32 %v1752, %v394
      %v1785 = vadd.f32 %v1753, %v395
      %v1786 = vadd.f32 %v1754, %v396
      %v1787 = vadd.f32 %v1755, %v397
      %1788 = vst.msk [vmem:[%s364] sm:$0xff] %vm398, %v1756
      %1789 = vst.msk [vmem:[%s364 + $0x8] sm:$0xff] %vm398, %v1757
      %1790 = vst.msk [vmem:[%s364 + $0x10] sm:$0xff] %vm398, %v1758
      %1791 = vst.msk [vmem:[%s364 + $0x18] sm:$0xff] %vm398, %v1759
      %1792 = vst.msk [vmem:[%s364 + $0x20] sm:$0xff] %vm398, %v1760
      %1793 = vst.msk [vmem:[%s364 + $0x28] sm:$0xff] %vm398, %v1761
      %1794 = vst.msk [vmem:[%s364 + $0x30] sm:$0xff] %vm398, %v1762
      %1795 = vst.msk [vmem:[%s364 + $0x38] sm:$0xff] %vm398, %v1763
      %1796 = vst.msk [vmem:[%s364 + $0x40] sm:$0xff] %vm398, %v1764
      %1797 = vst.msk [vmem:[%s364 + $0x48] sm:$0xff] %vm398, %v1765
      %1798 = vst.msk [vmem:[%s364 + $0x50] sm:$0xff] %vm398, %v1766
      %1799 = vst.msk [vmem:[%s364 + $0x58] sm:$0xff] %vm398, %v1767
      %1800 = vst.msk [vmem:[%s364 + $0x60] sm:$0xff] %vm398, %v1768
      %1801 = vst.msk [vmem:[%s364 + $0x68] sm:$0xff] %vm398, %v1769
      %1802 = vst.msk [vmem:[%s364 + $0x70] sm:$0xff] %vm398, %v1770
      %1803 = vst.msk [vmem:[%s364 + $0x78] sm:$0xff] %vm398, %v1771
      %1804 = vst.msk [vmem:[%s364 + $0x80] sm:$0xff] %vm398, %v1772
      %1805 = vst.msk [vmem:[%s364 + $0x88] sm:$0xff] %vm398, %v1773
      %1806 = vst.msk [vmem:[%s364 + $0x90] sm:$0xff] %vm398, %v1774
      %1807 = vst.msk [vmem:[%s364 + $0x98] sm:$0xff] %vm398, %v1775
      %1808 = vst.msk [vmem:[%s364 + $0xa0] sm:$0xff] %vm398, %v1776
      %1809 = vst.msk [vmem:[%s364 + $0xa8] sm:$0xff] %vm398, %v1777
      %1810 = vst.msk [vmem:[%s364 + $0xb0] sm:$0xff] %vm398, %v1778
      %1811 = vst.msk [vmem:[%s364 + $0xb8] sm:$0xff] %vm398, %v1779
      %1812 = vst.msk [vmem:[%s364 + $0xc0] sm:$0xff] %vm398, %v1780
      %1813 = vst.msk [vmem:[%s364 + $0xc8] sm:$0xff] %vm398, %v1781
      %1814 = vst.msk [vmem:[%s364 + $0xd0] sm:$0xff] %vm398, %v1782
      %1815 = vst.msk [vmem:[%s364 + $0xd8] sm:$0xff] %vm398, %v1783
      %1816 = vst.msk [vmem:[%s364 + $0xe0] sm:$0xff] %vm398, %v1784
      %1817 = vst.msk [vmem:[%s364 + $0xe8] sm:$0xff] %vm398, %v1785
      %1818 = vst.msk [vmem:[%s364 + $0xf0] sm:$0xff] %vm398, %v1786
      %1819 = vst.msk [vmem:[%s364 + $0xf8] sm:$0xff] %vm398, %v1787
      %s1820 = smul.u32 16, %s20
      %p1821 = scmp.lt.s32.totalorder %s19, 1
      %s1822 = scalar_select %p1821, %s19, 1
      %p1823 = scmp.lt.s32.totalorder %s1820, 15
      %s1824 = scalar_select %p1823, %s1820, 15
      %s1825 = smul.addr %s1824, 2
      %s1826 = smul.addr %s1822, 32
      %s1827 = sadd.s32 %s1825, %s1826
      %s1828 = smul.addr %s1827, 8
      %s1829 = scalar_lea.vmem %s4, %s1828
      // Predicated region
      $region37: #{tpu_custom_call.1} parent=35 // pred_check
        %p1830 = pneg %p168
      $region38: #{tpu_custom_call.1} parent=35 // pred_check_branch
        %1832 = sbr.rel (%p1830) target = $region40
      $region39: #{tpu_custom_call.1} parent=35 // pred_region
        %s1833 = smul.u32 16, %s20
      $region40: #{tpu_custom_call.1} parent=35 // pred_fallthru
        _
    $region36: #{tpu_custom_call.1} parent=5 // pred_fallthru
      _
    %p1834 = scmp.le.s32.totalorder 2, %s10
    // Predicated region
    $region41: #{tpu_custom_call.1} parent=5 // pred_check
      %p1835 = pneg %p1834
    $region42: #{tpu_custom_call.1} parent=5 // pred_check_branch
      %1837 = sbr.rel (%p1835) target = $region44
    $region43: #{tpu_custom_call.1} parent=5 // pred_region
      %s1838 = ssub.s32 %s10, 2
      // Predicated region
      $region45: #{tpu_custom_call.1} parent=43 // pred_check
        %p1839 = pneg %p174
      $region46: #{tpu_custom_call.1} parent=43 // pred_check_branch
        %1841 = sbr.rel (%p1839) target = $region48
      $region47: #{tpu_custom_call.1} parent=43 // pred_region
        %s1842 = smul.u32 16, %s22
        %p1843 = scmp.lt.s32.totalorder %s21, 1
        %s1844 = scalar_select %p1843, %s21, 1
        %p1845 = scmp.lt.s32.totalorder %s1842, 15
        %s1846 = scalar_select %p1845, %s1842, 15
        %s1847 = smul.addr %s1846, 2
        %s1848 = smul.addr %s1844, 32
        %s1849 = sadd.s32 %s1847, %s1848
        %s1850 = smul.addr %s1849, 8
        %s1851 = scalar_lea.vmem %s4, %s1850
      $region48: #{tpu_custom_call.1} parent=43 // pred_fallthru
        _
    $region44: #{tpu_custom_call.1} parent=5 // pred_fallthru
      _
  $region6: #{tpu_custom_call.1} parent=0 // loop_footer
    %s14 = sadd.s32 1, %s10
  $region7: #{tpu_custom_call.1} parent=0 // loop_footer_branch
    %9 = sbr.rel target = $region3
  $region8: #{tpu_custom_call.1} parent=0 // loop_exit
    _

</llo_original>
